<compile_context>
chip_gen: v7x
topology: tpu7x:2x2x1
jax: 0.10.0
libtpu: 0.0.40
codegen_flags: <defaults>
</compile_context>

<pallas_src>
import itertools

import jax
import jax.numpy as jnp
from jax.experimental import pallas as pl
from jax.experimental.pallas import tpu as pltpu


def _round_up(x, m):
    return ((x + m - 1) // m) * m


# ----------------------------------------------------------------------------
# Fused Pallas kernel (one grid step == one batch element)
# ----------------------------------------------------------------------------
def _fused_kernel(xg_ref, mask_ref, w1_ref, b1_ref, w2_ref, b2_ref,
                  wh_ref, bh_ref, out_ref):
    """Whole forward for one batch element.

    xg   [1, Cpad, Kpad]   subset inputs, block-placed along K per scale
    mask [Rapad, Cpad]     subset-inclusion aggregation mask (0/1)
    w1   [Kpad, GHpad]     block-diagonal first Linear of all scales
    b1   [Cpad, GHpad]     per-row first bias (scale-dependent, zero padded)
    w2   [GHpad, Dpad]     row-stacked second Linear of all scales
    b2   [Cpad, Dpad]      per-row second bias
    wh   [Dpad, Ppad]      fused [w_emb | w_node] head
    bh   [1, Ppad]         fused head bias
    out  [1, Rapad, Ppad]
    """
    # Relation MLPs for every computed subset of every scale at once.
    xs = jnp.maximum(xg_ref[0], 0.0)                                     # ReLU on inputs
    h = jnp.dot(xs, w1_ref[...], preferred_element_type=jnp.float32) + b1_ref[...]
    h = jnp.maximum(h, 0.0)
    o = jnp.dot(h, w2_ref[...], preferred_element_type=jnp.float32) + b2_ref[...]
    # Subset-sum aggregation over all computed subsets (single MXU push).
    acc = jnp.dot(mask_ref[...], o, preferred_element_type=jnp.float32)  # [Rapad, Dpad]
    # Fused embedding + node head (lane-dense 128-wide output).
    out = jnp.dot(acc, wh_ref[...], preferred_element_type=jnp.float32) + bh_ref[...]
    out_ref[0] = out.astype(out_ref.dtype)


# ----------------------------------------------------------------------------
# Module wrapper
# ----------------------------------------------------------------------------
def abstraction_embedding_forward(x, params, scales):
    B, n, F = x.shape
    scales = tuple(int(s) for s in scales)
    valid_scales = [s for s in scales if s <= n]
    if not valid_scales:
        # TODO(synk): process_input branch (random repetition of rows when no
        # scale fits the set size) requires host-side randomness; not translated.
        raise NotImplementedError("no valid scale <= set size")

    min_valid = min(valid_scales)
    H = params["relations"][valid_scales[0]][0].shape[1]
    D = params["w_emb"].shape[0]
    E = params["w_emb"].shape[1]
    N = params["w_node"].shape[1]

    # Ordered subsets, mirroring torch base_forward:
    #  - ascending scale, lexicographic combinations
    #  - computed (valid) scales always emit rows
    #  - non-computed scales emit rows only once out_dict is non-empty,
    #    i.e. only when scale > min(valid_scales)
    comp_groups = []      # [(scale, combos)] evaluated by a Relation MLP
    row_subsets = []      # subsets that get an output row
    for scale in range(1, n + 1):
        combos = list(itertools.combinations(range(n), scale))
        if scale in valid_scales:
            comp_groups.append((scale, combos))
            row_subsets.extend(combos)
        elif scale > min_valid:
            row_subsets.extend(combos)

    G = len(comp_groups)
    comp_subsets = [c for _, cbs in comp_groups for c in cbs]
    Ctot = len(comp_subsets)
    Ktot = sum(s * F for s, _ in comp_groups)
    Ra = len(row_subsets)

    Cpad = _round_up(Ctot, 8)
    Kpad = _round_up(Ktot, 128)
    GH = G * H
    GHpad = _round_up(GH, 128)
    Dpad = _round_up(D, 128)
    Rapad = _round_up(Ra, 8)
    Ppad = _round_up(E + N, 128)

    f32 = jnp.float32

    # ---- subset inputs, block-placed along the combined K axis --------------
    xg_groups = []
    koff = 0
    for s, combos in comp_groups:
        rows = [jnp.concatenate([x[:, i, :] for i in c], axis=-1)[:, None, :]
                for c in combos]
        blk = jnp.concatenate(rows, axis=1)                              # [B, C_g, s*F]
        blk = jnp.pad(blk, ((0, 0), (0, 0), (koff, Ktot - koff - s * F)))
        xg_groups.append(blk)
        koff += s * F
    xg = jnp.concatenate(xg_groups, axis=1)                              # [B, Ctot, Ktot]
    xg = jnp.pad(xg, ((0, 0), (0, Cpad - Ctot), (0, Kpad - Ktot))).astype(f32)

    # ---- block-diagonal layer-1, row-stacked layer-2, per-row biases --------
    # A row from scale-group g has nonzeros only in K-block g, and W1 of group
    # g occupies (K-block g, H-block g), so a single matmul computes every
    # scale's first Linear exactly; layer 2 stacks W2_g over the H blocks.
    w1_blks, b1_rows, w2_blks, b2_rows = [], [], [], []
    for g, (s, combos) in enumerate(comp_groups):
        w1, b1, w2, b2 = params["relations"][s]
        w1_blks.append(jnp.pad(w1, ((0, 0), (g * H, (G - 1 - g) * H))))  # [s*F, GH]
        b1_rows.append(jnp.broadcast_to(
            jnp.pad(b1, ((0, 0), (g * H, (G - 1 - g) * H))), (len(combos), GH)))
        w2_blks.append(w2)                                               # [H, D]
        b2_rows.append(jnp.broadcast_to(b2, (len(combos), D)))
    w1c = jnp.pad(jnp.concatenate(w1_blks, axis=0),
                  ((0, Kpad - Ktot), (0, GHpad - GH))).astype(f32)       # [Kpad, GHpad]
    b1c = jnp.pad(jnp.concatenate(b1_rows, axis=0),
                  ((0, Cpad - Ctot), (0, GHpad - GH))).astype(f32)       # [Cpad, GHpad]
    w2c = jnp.pad(jnp.concatenate(w2_blks, axis=0),
                  ((0, GHpad - GH), (0, Dpad - D))).astype(f32)          # [GHpad, Dpad]
    b2c = jnp.pad(jnp.concatenate(b2_rows, axis=0),
                  ((0, Cpad - Ctot), (0, Dpad - D))).astype(f32)         # [Cpad, Dpad]

    # ---- subset-inclusion aggregation mask (static 0/1) ---------------------
    m = [[1.0 if set(c).issubset(set(r)) else 0.0 for c in comp_subsets]
         for r in row_subsets]
    mask = jnp.pad(jnp.asarray(m, dtype=f32), ((0, Rapad - Ra), (0, Cpad - Ctot)))

    # ---- fused, lane-padded embedding + node head ---------------------------
    w_head = jnp.concatenate([params["w_emb"], params["w_node"]], axis=1)   # [D, E+N]
    b_head = jnp.concatenate([params["b_emb"], params["b_node"]], axis=1)   # [1, E+N]
    w_head = jnp.pad(w_head, ((0, Dpad - D), (0, Ppad - (E + N)))).astype(f32)
    b_head = jnp.pad(b_head, ((0, 0), (0, Ppad - (E + N)))).astype(f32)

    flops = B * (2 * Cpad * Kpad * GHpad + 2 * Cpad * GHpad * Dpad
                 + 2 * Rapad * Cpad * Dpad + 2 * Rapad * Dpad * Ppad)
    bytes_accessed = 4 * (int(xg.size) + int(w1c.size) + int(b1c.size)
                          + int(w2c.size) + int(b2c.size) + int(mask.size)
                          + int(w_head.size) + int(b_head.size)
                          + B * Rapad * Ppad)

    out = pl.pallas_call(
        _fused_kernel,
        grid=(B,),
        in_specs=[
            pl.BlockSpec((1, Cpad, Kpad), lambda b: (b, 0, 0)),
            pl.BlockSpec(mask.shape, lambda b: (0, 0)),
            pl.BlockSpec(w1c.shape, lambda b: (0, 0)),
            pl.BlockSpec(b1c.shape, lambda b: (0, 0)),
            pl.BlockSpec(w2c.shape, lambda b: (0, 0)),
            pl.BlockSpec(b2c.shape, lambda b: (0, 0)),
            pl.BlockSpec(w_head.shape, lambda b: (0, 0)),
            pl.BlockSpec(b_head.shape, lambda b: (0, 0)),
        ],
        out_specs=pl.BlockSpec((1, Rapad, Ppad), lambda b: (b, 0, 0)),
        out_shape=jax.ShapeDtypeStruct((B, Rapad, Ppad), f32),
        compiler_params=pltpu.CompilerParams(dimension_semantics=("parallel",)),
        cost_estimate=pl.CostEstimate(flops=int(flops), transcendentals=0,
                                      bytes_accessed=int(bytes_accessed)),
    )(xg, mask, w1c, b1c, w2c, b2c, w_head, b_head)

    emb = out[:, :Ra, :E]                                                # [B, Ra, E]
    node_out = jnp.swapaxes(out[:, :Ra, E:E + N], -2, -1)                # [B, N, Ra]
    return emb, node_out


# ----------------------------------------------------------------------------
# Pure-JAX reference (mirrors the PyTorch base_forward / forward exactly)
# ----------------------------------------------------------------------------
def reference_forward(x, params, scales):
    B, n, F = x.shape
    valid = [s for s in scales if s <= n]
    out_dict = {}
    rows = []
    for scale in range(1, n + 1):
        combos = list(itertools.combinations(range(n), scale))
        if scale in valid:
            w1, b1, w2, b2 = params["relations"][scale]
            for rset in combos:
                xi = x[:, list(rset), :].reshape(B, scale * F)
                h = jnp.maximum(jnp.maximum(xi, 0.0) @ w1 + b1, 0.0)
                o = h @ w2 + b2
                out_dict[rset] = o
                acc = sum(v for k, v in out_dict.items() if set(k).issubset(rset))
                rows.append(acc)
        else:
            for rset in combos:
                if out_dict:
                    acc = sum(v for k, v in out_dict.items() if set(k).issubset(rset))
                    rows.append(acc)
    out = jnp.stack(rows, axis=1)                                        # [B, Ra, D]
    emb = out @ params["w_emb"] + params["b_emb"]
    node = out @ params["w_node"] + params["b_node"]
    return emb, jnp.swapaxes(node, -2, -1)


# ----------------------------------------------------------------------------
# Deterministic parameter init (torch.nn.Linear-style uniform bounds)
# ----------------------------------------------------------------------------
def init_params(key, in_features, out_features, bottleneck_dim,
                num_nodes, embedding_dim, scales):
    def linear(k, fan_in, fan_out):
        k1, k2 = jax.random.split(k)
        bound = 1.0 / jnp.sqrt(fan_in)
        w = jax.random.uniform(k1, (fan_in, fan_out), jnp.float32, -bound, bound)
        b = jax.random.uniform(k2, (1, fan_out), jnp.float32, -bound, bound)
        return w, b

    params = {"relations": {}}
    keys = jax.random.split(key, len(scales) * 2 + 2)
    for i, s in enumerate(scales):
        w1, b1 = linear(keys[2 * i], s * in_features, bottleneck_dim)
        w2, b2 = linear(keys[2 * i + 1], bottleneck_dim, out_features)
        params["relations"][int(s)] = (w1, b1, w2, b2)
    params["w_emb"], params["b_emb"] = linear(keys[-2], out_features, embedding_dim)
    params["w_node"], params["b_node"] = linear(keys[-1], out_features, num_nodes)
    return params


if __name__ == "__main__":
    B, n = 2, 4
    in_features = 32
    out_features = 32
    bottleneck_dim = 128
    num_nodes = 64
    embedding_dim = 48

    key = jax.random.PRNGKey(0)
    kx, kp = jax.random.split(key)
    x = jax.random.normal(kx, (B, n, in_features), dtype=jnp.float32)

    fwd = jax.jit(abstraction_embedding_forward, static_argnums=(2,))

    # Config 1: all scales valid (2^n - 1 rows). Config 2: some scales skipped,
    # exercising the torch row-skipping rule (out_dict-empty case).
    for scales in ((1, 2, 3, 4), (2, 4)):
        params = init_params(kp, in_features, out_features, bottleneck_dim,
                             num_nodes, embedding_dim, scales)

        emb, node_out = fwd(x, params, scales)
        emb = jax.block_until_ready(emb)
        node_out = jax.block_until_ready(node_out)

        ref_emb, ref_node = reference_forward(x, params, list(scales))
        Ra = ref_emb.shape[1]
        assert emb.shape == (B, Ra, embedding_dim), (emb.shape, Ra)
        assert node_out.shape == (B, num_nodes, Ra), node_out.shape
        assert jnp.allclose(emb, ref_emb, atol=1e-4, rtol=1e-4)
        assert jnp.allclose(node_out, ref_node, atol=1e-4, rtol=1e-4)

    print("KERNEL_OK")
</pallas_src>

<mosaic_0001>
module attributes {stable_mosaic.version = 11 : i64} {
  func.func @_fused_kernel(%arg0: i32, %arg1: memref<1x16x384xf32, #tpu.memory_space<vmem>>, %arg2: memref<16x16xf32, #tpu.memory_space<vmem>>, %arg3: memref<384x512xf32, #tpu.memory_space<vmem>>, %arg4: memref<16x512xf32, #tpu.memory_space<vmem>>, %arg5: memref<512x128xf32, #tpu.memory_space<vmem>>, %arg6: memref<16x128xf32, #tpu.memory_space<vmem>>, %arg7: memref<128x128xf32, #tpu.memory_space<vmem>>, %arg8: memref<1x128xf32, #tpu.memory_space<vmem>>, %arg9: memref<1x16x128xf32, #tpu.memory_space<vmem>>) attributes {dimension_semantics = [#tpu.dimension_semantics<parallel>], iteration_bounds = array<i64: 2>, scalar_prefetch = 0 : i64, scratch_operands = 0 : i64, tpu.core_type = #tpu.core_type<tc>, window_params = [{transform_indices = @transform_0, window_bounds = array<i64: 1, 16, 384>}, {pipeline_mode = #tpu.pipeline_mode<synchronous>, transform_indices = @transform_1, window_bounds = array<i64: 16, 16>}, {pipeline_mode = #tpu.pipeline_mode<synchronous>, transform_indices = @transform_2, window_bounds = array<i64: 384, 512>}, {pipeline_mode = #tpu.pipeline_mode<synchronous>, transform_indices = @transform_3, window_bounds = array<i64: 16, 512>}, {pipeline_mode = #tpu.pipeline_mode<synchronous>, transform_indices = @transform_4, window_bounds = array<i64: 512, 128>}, {pipeline_mode = #tpu.pipeline_mode<synchronous>, transform_indices = @transform_5, window_bounds = array<i64: 16, 128>}, {pipeline_mode = #tpu.pipeline_mode<synchronous>, transform_indices = @transform_6, window_bounds = array<i64: 128, 128>}, {pipeline_mode = #tpu.pipeline_mode<synchronous>, transform_indices = @transform_7, window_bounds = array<i64: 1, 128>}, {transform_indices = @transform_8, window_bounds = array<i64: 1, 16, 128>}]} {
    %c0 = arith.constant 0 : index
    %c0_0 = arith.constant 0 : index
    %c0_1 = arith.constant 0 : index
    %0 = vector.load %arg1[%c0, %c0_0, %c0_1] : memref<1x16x384xf32, #tpu.memory_space<vmem>>, vector<1x16x384xf32>
    %1 = vector.shape_cast %0 : vector<1x16x384xf32> to vector<16x384xf32>
    %cst = arith.constant 0.000000e+00 : f32
    %2 = vector.broadcast %cst : f32 to vector<16x384xf32>
    %3 = arith.maximumf %1, %2 : vector<16x384xf32>
    %c0_2 = arith.constant 0 : index
    %c0_3 = arith.constant 0 : index
    %4 = vector.load %arg3[%c0_2, %c0_3] : memref<384x512xf32, #tpu.memory_space<vmem>>, vector<384x512xf32>
    %cst_4 = arith.constant dense<0.000000e+00> : vector<16x512xf32>
    %5 = tpu.matmul %3, %4, %cst_4 {dimension_numbers = #tpu.dot_dimension_numbers<[1], [0], [0], [1], [0, 0, 1, 1], [], []>} : vector<16x384xf32>, vector<384x512xf32>, vector<16x512xf32> -> vector<16x512xf32>
    %c0_5 = arith.constant 0 : index
    %c0_6 = arith.constant 0 : index
    %6 = vector.load %arg4[%c0_5, %c0_6] : memref<16x512xf32, #tpu.memory_space<vmem>>, vector<16x512xf32>
    %7 = arith.addf %5, %6 : vector<16x512xf32>
    %cst_7 = arith.constant 0.000000e+00 : f32
    %8 = vector.broadcast %cst_7 : f32 to vector<16x512xf32>
    %9 = arith.maximumf %7, %8 : vector<16x512xf32>
    %c0_8 = arith.constant 0 : index
    %c0_9 = arith.constant 0 : index
    %10 = vector.load %arg5[%c0_8, %c0_9] : memref<512x128xf32, #tpu.memory_space<vmem>>, vector<512x128xf32>
    %cst_10 = arith.constant dense<0.000000e+00> : vector<16x128xf32>
    %11 = tpu.matmul %9, %10, %cst_10 {dimension_numbers = #tpu.dot_dimension_numbers<[1], [0], [0], [1], [0, 0, 1, 1], [], []>} : vector<16x512xf32>, vector<512x128xf32>, vector<16x128xf32> -> vector<16x128xf32>
    %c0_11 = arith.constant 0 : index
    %c0_12 = arith.constant 0 : index
    %12 = vector.load %arg6[%c0_11, %c0_12] : memref<16x128xf32, #tpu.memory_space<vmem>>, vector<16x128xf32>
    %13 = arith.addf %11, %12 : vector<16x128xf32>
    %c0_13 = arith.constant 0 : index
    %c0_14 = arith.constant 0 : index
    %14 = vector.load %arg2[%c0_13, %c0_14] : memref<16x16xf32, #tpu.memory_space<vmem>>, vector<16x16xf32>
    %cst_15 = arith.constant dense<0.000000e+00> : vector<16x128xf32>
    %15 = tpu.matmul %14, %13, %cst_15 {dimension_numbers = #tpu.dot_dimension_numbers<[1], [0], [0], [1], [0, 0, 1, 1], [], []>} : vector<16x16xf32>, vector<16x128xf32>, vector<16x128xf32> -> vector<16x128xf32>
    %c0_16 = arith.constant 0 : index
    %c0_17 = arith.constant 0 : index
    %16 = vector.load %arg7[%c0_16, %c0_17] : memref<128x128xf32, #tpu.memory_space<vmem>>, vector<128x128xf32>
    %cst_18 = arith.constant dense<0.000000e+00> : vector<16x128xf32>
    %17 = tpu.matmul %15, %16, %cst_18 {dimension_numbers = #tpu.dot_dimension_numbers<[1], [0], [0], [1], [0, 0, 1, 1], [], []>} : vector<16x128xf32>, vector<128x128xf32>, vector<16x128xf32> -> vector<16x128xf32>
    %c0_19 = arith.constant 0 : index
    %c0_20 = arith.constant 0 : index
    %18 = vector.load %arg8[%c0_19, %c0_20] : memref<1x128xf32, #tpu.memory_space<vmem>>, vector<1x128xf32>
    %19 = vector.broadcast %18 : vector<1x128xf32> to vector<16x128xf32>
    %20 = arith.addf %17, %19 : vector<16x128xf32>
    %c0_21 = arith.constant 0 : index
    %c0_22 = arith.constant 0 : index
    %c0_23 = arith.constant 0 : index
    %21 = vector.load %arg9[%c0_21, %c0_22, %c0_23] : memref<1x16x128xf32, #tpu.memory_space<vmem>>, vector<1x16x128xf32>
    %22 = vector.shape_cast %21 : vector<1x16x128xf32> to vector<16x128xf32>
    %23 = vector.shape_cast %20 : vector<16x128xf32> to vector<1x16x128xf32>
    tpu.vector_store %arg9[%c0_21, %c0_22, %c0_23], %23 {strides = array<i32>} : memref<1x16x128xf32, #tpu.memory_space<vmem>>, vector<1x16x128xf32>,
    return
  }
  func.func @transform_0(%arg0: i32) -> (i32, i32, i32) {
    %c0_i32 = arith.constant 0 : i32
    %c0_i32_0 = arith.constant 0 : i32
    %c0_i32_1 = arith.constant 0 : i32
    return %arg0, %c0_i32, %c0_i32_0 : i32, i32, i32
  }
  func.func @transform_1(%arg0: i32) -> (i32, i32) {
    %c0_i32 = arith.constant 0 : i32
    %c0_i32_0 = arith.constant 0 : i32
    %c0_i32_1 = arith.constant 0 : i32
    return %c0_i32, %c0_i32_0 : i32, i32
  }
  func.func @transform_2(%arg0: i32) -> (i32, i32) {
    %c0_i32 = arith.constant 0 : i32
    %c0_i32_0 = arith.constant 0 : i32
    %c0_i32_1 = arith.constant 0 : i32
    return %c0_i32, %c0_i32_0 : i32, i32
  }
  func.func @transform_3(%arg0: i32) -> (i32, i32) {
    %c0_i32 = arith.constant 0 : i32
    %c0_i32_0 = arith.constant 0 : i32
    %c0_i32_1 = arith.constant 0 : i32
    return %c0_i32, %c0_i32_0 : i32, i32
  }
  func.func @transform_4(%arg0: i32) -> (i32, i32) {
    %c0_i32 = arith.constant 0 : i32
    %c0_i32_0 = arith.constant 0 : i32
    %c0_i32_1 = arith.constant 0 : i32
    return %c0_i32, %c0_i32_0 : i32, i32
  }
  func.func @transform_5(%arg0: i32) -> (i32, i32) {
    %c0_i32 = arith.constant 0 : i32
    %c0_i32_0 = arith.constant 0 : i32
    %c0_i32_1 = arith.constant 0 : i32
    return %c0_i32, %c0_i32_0 : i32, i32
  }
  func.func @transform_6(%arg0: i32) -> (i32, i32) {
    %c0_i32 = arith.constant 0 : i32
    %c0_i32_0 = arith.constant 0 : i32
    %c0_i32_1 = arith.constant 0 : i32
    return %c0_i32, %c0_i32_0 : i32, i32
  }
  func.func @transform_7(%arg0: i32) -> (i32, i32) {
    %c0_i32 = arith.constant 0 : i32
    %c0_i32_0 = arith.constant 0 : i32
    %c0_i32_1 = arith.constant 0 : i32
    return %c0_i32, %c0_i32_0 : i32, i32
  }
  func.func @transform_8(%arg0: i32) -> (i32, i32, i32) {
    %c0_i32 = arith.constant 0 : i32
    %c0_i32_0 = arith.constant 0 : i32
    %c0_i32_1 = arith.constant 0 : i32
    return %arg0, %c0_i32, %c0_i32_0 : i32, i32, i32
  }
}

</mosaic_0001>

<llo_original>
// kernel: abstraction_embedding_forward.1
$region0: #{abstraction_embedding_forward.1}
  #allocation0 [shape = 'u32[]', space=smem, size = 0x4, offset = 0x4, fixed_abs, tag = 'smem constant byte address 0x4 - core index']
  #allocation1 [shape = 'u32[144,128]{1,0:T(1,128)}', space=vmem, size = 0x12000, scoped, tag = 'internal scratch']
  %s0 = inlined_call_operand.vmem [shape: f32[2,16,384], index: 0, kind: input, shape index: {}]
  %s1 = inlined_call_operand.vmem [shape: f32[16,16], index: 1, kind: input, shape index: {}]
  %s2 = inlined_call_operand.vmem [shape: f32[384,512], index: 2, kind: input, shape index: {}]
  %s3 = inlined_call_operand.vmem [shape: f32[16,512], index: 3, kind: input, shape index: {}]
  %s4 = inlined_call_operand.vmem [shape: f32[512,128], index: 4, kind: input, shape index: {}]
  %s5 = inlined_call_operand.vmem [shape: f32[16,128], index: 5, kind: input, shape index: {}]
  %s6 = inlined_call_operand.vmem [shape: f32[128,128], index: 6, kind: input, shape index: {}]
  %s7 = inlined_call_operand.vmem [shape: f32[1,128], index: 7, kind: input, shape index: {}]
  %s8 = inlined_call_operand.vmem [shape: f32[2,16,128], index: 8, kind: output, shape index: {}]
  %s9 = sld [smem:[#allocation0]]
  $region65: #{abstraction_embedding_forward.1} parent=0
    _
  %s11 = ssub.s32 1, %s9
  %s12 = scalar_select 0, %s11, %s9
  loop: start=0, step=1, limit=4
  $region2: #{abstraction_embedding_forward.1} parent=0 // loop_pre_header
    _
  $region3: #{abstraction_embedding_forward.1} parent=0 // loop_header
    %s14 = sphi 0, %s18
    %p15 = scmp.ge.s32.totalorder %s14, 4
    %s24 = sphi 0, %s26
    %s27 = sphi 0, %s24
    %s28 = sphi 0, %s27
    %s44 = sphi 0, %s28
    %s48 = sphi 0, %s48
    %s50 = sphi 0, %s48
    %s51 = sphi 0, %s50
    %s65 = sphi 0, %s51
    %s69 = sphi 0, %s69
    %s71 = sphi 0, %s69
    %s72 = sphi 0, %s71
    %s86 = sphi 0, %s72
    %s90 = sphi 0, %s90
    %s92 = sphi 0, %s90
    %s93 = sphi 0, %s92
    %s107 = sphi 0, %s93
    %s111 = sphi 0, %s111
    %s113 = sphi 0, %s111
    %s114 = sphi 0, %s113
    %s128 = sphi 0, %s114
    %s132 = sphi 0, %s132
    %s134 = sphi 0, %s132
    %s135 = sphi 0, %s134
    %s149 = sphi 0, %s135
    %s153 = sphi 0, %s153
    %s155 = sphi 0, %s153
    %s156 = sphi 0, %s155
    %s170 = sphi 0, %s156
    %s174 = sphi 0, %s174
    %s176 = sphi 0, %s174
    %s177 = sphi 0, %s176
    %s191 = sphi 0, %s177
    %s197 = sphi 0, %s199
    %s200 = sphi 0, %s197
    %s201 = sphi 0, %s200
    %s217 = sphi 0, %s201
  $region4: #{abstraction_embedding_forward.1} parent=0 // loop_header_branch
    %17 = sbr.rel (%p15) target = $region8
  $region5: #{abstraction_embedding_forward.1} parent=0 // loop_body
    %s19 = ssub.s32 %s14, 1
    %s20 = ssub.s32 %s14, 2
    %s21 = sadd.s32 %s14, 1
    %s22 = ssub.s32 %s14, %s21
    %p23 = scmp.eq.s32.totalorder %s22, 0
    %s25 = sadd.s32 %s24, 1
    %s26 = scalar_select %p23, %s24, %s25
    %p29 = pneg %p23
    %p30 = scmp.eq.s32.totalorder %s14, 1
    %p31 = por %p29, %p30
    %p32 = scmp.ne.s32.totalorder %s24, %s27
    %p33 = scmp.eq.s32.totalorder %s14, 0
    %p34 = por %p32, %p33
    %p35 = scmp.ne.s32.totalorder %s24, %s27
    %p36 = scmp.eq.s32.totalorder %s19, 1
    %p37 = por %p35, %p36
    %p38 = scmp.ne.s32.totalorder %s27, %s28
    %p39 = scmp.eq.s32.totalorder %s19, 0
    %p40 = por %p38, %p39
    %p41 = scmp.ne.s32.totalorder %s27, %s28
    %p42 = scmp.eq.s32.totalorder %s20, 1
    %p43 = por %p41, %p42
    %p45 = scmp.ne.s32.totalorder %s28, %s44
    %p46 = scmp.eq.s32.totalorder %s20, 0
    %p47 = por %p45, %p46
    %s49 = sadd.s32 %s48, 1
    %p52 = scmp.eq.s32.totalorder %s14, 1
    %p53 = scmp.ne.s32.totalorder %s48, %s50
    %p54 = scmp.eq.s32.totalorder %s14, 0
    %p55 = por %p53, %p54
    %p56 = scmp.ne.s32.totalorder %s48, %s50
    %p57 = scmp.eq.s32.totalorder %s19, 1
    %p58 = por %p56, %p57
    %p59 = scmp.ne.s32.totalorder %s50, %s51
    %p60 = scmp.eq.s32.totalorder %s19, 0
    %p61 = por %p59, %p60
    %p62 = scmp.ne.s32.totalorder %s50, %s51
    %p63 = scmp.eq.s32.totalorder %s20, 1
    %p64 = por %p62, %p63
    %p66 = scmp.ne.s32.totalorder %s51, %s65
    %p67 = scmp.eq.s32.totalorder %s20, 0
    %p68 = por %p66, %p67
    %s70 = sadd.s32 %s69, 1
    %p73 = scmp.eq.s32.totalorder %s14, 1
    %p74 = scmp.ne.s32.totalorder %s69, %s71
    %p75 = scmp.eq.s32.totalorder %s14, 0
    %p76 = por %p74, %p75
    %p77 = scmp.ne.s32.totalorder %s69, %s71
    %p78 = scmp.eq.s32.totalorder %s19, 1
    %p79 = por %p77, %p78
    %p80 = scmp.ne.s32.totalorder %s71, %s72
    %p81 = scmp.eq.s32.totalorder %s19, 0
    %p82 = por %p80, %p81
    %p83 = scmp.ne.s32.totalorder %s71, %s72
    %p84 = scmp.eq.s32.totalorder %s20, 1
    %p85 = por %p83, %p84
    %p87 = scmp.ne.s32.totalorder %s72, %s86
    %p88 = scmp.eq.s32.totalorder %s20, 0
    %p89 = por %p87, %p88
    %s91 = sadd.s32 %s90, 1
    %p94 = scmp.eq.s32.totalorder %s14, 1
    %p95 = scmp.ne.s32.totalorder %s90, %s92
    %p96 = scmp.eq.s32.totalorder %s14, 0
    %p97 = por %p95, %p96
    %p98 = scmp.ne.s32.totalorder %s90, %s92
    %p99 = scmp.eq.s32.totalorder %s19, 1
    %p100 = por %p98, %p99
    %p101 = scmp.ne.s32.totalorder %s92, %s93
    %p102 = scmp.eq.s32.totalorder %s19, 0
    %p103 = por %p101, %p102
    %p104 = scmp.ne.s32.totalorder %s92, %s93
    %p105 = scmp.eq.s32.totalorder %s20, 1
    %p106 = por %p104, %p105
    %p108 = scmp.ne.s32.totalorder %s93, %s107
    %p109 = scmp.eq.s32.totalorder %s20, 0
    %p110 = por %p108, %p109
    %s112 = sadd.s32 %s111, 1
    %p115 = scmp.eq.s32.totalorder %s14, 1
    %p116 = scmp.ne.s32.totalorder %s111, %s113
    %p117 = scmp.eq.s32.totalorder %s14, 0
    %p118 = por %p116, %p117
    %p119 = scmp.ne.s32.totalorder %s111, %s113
    %p120 = scmp.eq.s32.totalorder %s19, 1
    %p121 = por %p119, %p120
    %p122 = scmp.ne.s32.totalorder %s113, %s114
    %p123 = scmp.eq.s32.totalorder %s19, 0
    %p124 = por %p122, %p123
    %p125 = scmp.ne.s32.totalorder %s113, %s114
    %p126 = scmp.eq.s32.totalorder %s20, 1
    %p127 = por %p125, %p126
    %p129 = scmp.ne.s32.totalorder %s114, %s128
    %p130 = scmp.eq.s32.totalorder %s20, 0
    %p131 = por %p129, %p130
    %s133 = sadd.s32 %s132, 1
    %p136 = scmp.eq.s32.totalorder %s14, 1
    %p137 = scmp.ne.s32.totalorder %s132, %s134
    %p138 = scmp.eq.s32.totalorder %s14, 0
    %p139 = por %p137, %p138
    %p140 = scmp.ne.s32.totalorder %s132, %s134
    %p141 = scmp.eq.s32.totalorder %s19, 1
    %p142 = por %p140, %p141
    %p143 = scmp.ne.s32.totalorder %s134, %s135
    %p144 = scmp.eq.s32.totalorder %s19, 0
    %p145 = por %p143, %p144
    %p146 = scmp.ne.s32.totalorder %s134, %s135
    %p147 = scmp.eq.s32.totalorder %s20, 1
    %p148 = por %p146, %p147
    %p150 = scmp.ne.s32.totalorder %s135, %s149
    %p151 = scmp.eq.s32.totalorder %s20, 0
    %p152 = por %p150, %p151
    %s154 = sadd.s32 %s153, 1
    %p157 = scmp.eq.s32.totalorder %s14, 1
    %p158 = scmp.ne.s32.totalorder %s153, %s155
    %p159 = scmp.eq.s32.totalorder %s14, 0
    %p160 = por %p158, %p159
    %p161 = scmp.ne.s32.totalorder %s153, %s155
    %p162 = scmp.eq.s32.totalorder %s19, 1
    %p163 = por %p161, %p162
    %p164 = scmp.ne.s32.totalorder %s155, %s156
    %p165 = scmp.eq.s32.totalorder %s19, 0
    %p166 = por %p164, %p165
    %p167 = scmp.ne.s32.totalorder %s155, %s156
    %p168 = scmp.eq.s32.totalorder %s20, 1
    %p169 = por %p167, %p168
    %p171 = scmp.ne.s32.totalorder %s156, %s170
    %p172 = scmp.eq.s32.totalorder %s20, 0
    %p173 = por %p171, %p172
    %s175 = sadd.s32 %s174, 1
    %p178 = scmp.eq.s32.totalorder %s14, 1
    %p179 = scmp.ne.s32.totalorder %s174, %s176
    %p180 = scmp.eq.s32.totalorder %s14, 0
    %p181 = por %p179, %p180
    %p182 = scmp.ne.s32.totalorder %s174, %s176
    %p183 = scmp.eq.s32.totalorder %s19, 1
    %p184 = por %p182, %p183
    %p185 = scmp.ne.s32.totalorder %s176, %s177
    %p186 = scmp.eq.s32.totalorder %s19, 0
    %p187 = por %p185, %p186
    %p188 = scmp.ne.s32.totalorder %s176, %s177
    %p189 = scmp.eq.s32.totalorder %s20, 1
    %p190 = por %p188, %p189
    %p192 = scmp.ne.s32.totalorder %s177, %s191
    %p193 = scmp.eq.s32.totalorder %s20, 0
    %p194 = por %p192, %p193
    %s195 = ssub.s32 %s14, %s21
    %p196 = scmp.eq.s32.totalorder %s195, 0
    %s198 = sadd.s32 %s197, 1
    %s199 = scalar_select %p196, %s197, %s198
    %p202 = pneg %p196
    %p203 = scmp.eq.s32.totalorder %s14, 1
    %p204 = por %p202, %p203
    %p205 = scmp.ne.s32.totalorder %s197, %s200
    %p206 = scmp.eq.s32.totalorder %s14, 0
    %p207 = por %p205, %p206
    %p208 = scmp.ne.s32.totalorder %s197, %s200
    %p209 = scmp.eq.s32.totalorder %s19, 1
    %p210 = por %p208, %p209
    %p211 = scmp.ne.s32.totalorder %s200, %s201
    %p212 = scmp.eq.s32.totalorder %s19, 0
    %p213 = por %p211, %p212
    %p214 = scmp.ne.s32.totalorder %s200, %s201
    %p215 = scmp.eq.s32.totalorder %s20, 1
    %p216 = por %p214, %p215
    %p218 = scmp.ne.s32.totalorder %s201, %s217
    %p219 = scmp.eq.s32.totalorder %s20, 0
    %p220 = por %p218, %p219
    %p221 = scmp.le.s32.totalorder 1, %s14
    %p222 = scmp.lt.s32.totalorder %s14, 3
    %p223 = pnand %p221, %p222
    %p224 = pneg %p223
    // Predicated region
    $region9: #{abstraction_embedding_forward.1} parent=5 // pred_check
      _
    $region10: #{abstraction_embedding_forward.1} parent=5 // pred_check_branch
      %226 = sbr.rel (%p223) target = $region12
    $region11: #{abstraction_embedding_forward.1} parent=5 // pred_region
      %s227 = ssub.s32 %s14, 1
      // Predicated region
      $region13: #{abstraction_embedding_forward.1} parent=11 // pred_check
        %p228 = pneg %p61
      $region14: #{abstraction_embedding_forward.1} parent=11 // pred_check_branch
        %230 = sbr.rel (%p228) target = $region16
      $region15: #{abstraction_embedding_forward.1} parent=11 // pred_region
        _
      $region16: #{abstraction_embedding_forward.1} parent=11 // pred_fallthru
        _
      // Predicated region
      $region17: #{abstraction_embedding_forward.1} parent=11 // pred_check
        %p231 = pneg %p82
      $region18: #{abstraction_embedding_forward.1} parent=11 // pred_check_branch
        %233 = sbr.rel (%p231) target = $region20
      $region19: #{abstraction_embedding_forward.1} parent=11 // pred_region
        _
      $region20: #{abstraction_embedding_forward.1} parent=11 // pred_fallthru
        _
      // Predicated region
      $region21: #{abstraction_embedding_forward.1} parent=11 // pred_check
        %p234 = pneg %p103
      $region22: #{abstraction_embedding_forward.1} parent=11 // pred_check_branch
        %236 = sbr.rel (%p234) target = $region24
      $region23: #{abstraction_embedding_forward.1} parent=11 // pred_region
        _
      $region24: #{abstraction_embedding_forward.1} parent=11 // pred_fallthru
        _
      // Predicated region
      $region25: #{abstraction_embedding_forward.1} parent=11 // pred_check
        %p237 = pneg %p124
      $region26: #{abstraction_embedding_forward.1} parent=11 // pred_check_branch
        %239 = sbr.rel (%p237) target = $region28
      $region27: #{abstraction_embedding_forward.1} parent=11 // pred_region
        _
      $region28: #{abstraction_embedding_forward.1} parent=11 // pred_fallthru
        _
      // Predicated region
      $region29: #{abstraction_embedding_forward.1} parent=11 // pred_check
        %p240 = pneg %p145
      $region30: #{abstraction_embedding_forward.1} parent=11 // pred_check_branch
        %242 = sbr.rel (%p240) target = $region32
      $region31: #{abstraction_embedding_forward.1} parent=11 // pred_region
        _
      $region32: #{abstraction_embedding_forward.1} parent=11 // pred_fallthru
        _
      // Predicated region
      $region33: #{abstraction_embedding_forward.1} parent=11 // pred_check
        %p243 = pneg %p166
      $region34: #{abstraction_embedding_forward.1} parent=11 // pred_check_branch
        %245 = sbr.rel (%p243) target = $region36
      $region35: #{abstraction_embedding_forward.1} parent=11 // pred_region
        _
      $region36: #{abstraction_embedding_forward.1} parent=11 // pred_fallthru
        _
      // Predicated region
      $region37: #{abstraction_embedding_forward.1} parent=11 // pred_check
        %p246 = pneg %p187
      $region38: #{abstraction_embedding_forward.1} parent=11 // pred_check_branch
        %248 = sbr.rel (%p246) target = $region40
      $region39: #{abstraction_embedding_forward.1} parent=11 // pred_region
        _
      $region40: #{abstraction_embedding_forward.1} parent=11 // pred_fallthru
        _
    $region12: #{abstraction_embedding_forward.1} parent=5 // pred_fallthru
      _
    %p249 = scmp.lt.s32.totalorder %s14, 2
    // Predicated region
    $region41: #{abstraction_embedding_forward.1} parent=5 // pred_check
      %p250 = pneg %p249
    $region42: #{abstraction_embedding_forward.1} parent=5 // pred_check_branch
      %252 = sbr.rel (%p250) target = $region44
    $region43: #{abstraction_embedding_forward.1} parent=5 // pred_region
      // Predicated region
      $region45: #{abstraction_embedding_forward.1} parent=43 // pred_check
        %p253 = pneg %p34
      $region46: #{abstraction_embedding_forward.1} parent=43 // pred_check_branch
        %255 = sbr.rel (%p253) target = $region48
      $region47: #{abstraction_embedding_forward.1} parent=43 // pred_region
        %p256 = scmp.lt.s32.totalorder %s14, 1
        %s257 = scalar_select %p256, %s14, 1
        %s258 = smul.addr %s257, 6
        %s259 = smul.addr %s258, 8
        %s260 = scalar_lea.vmem %s0, %s259
      $region48: #{abstraction_embedding_forward.1} parent=43 // pred_fallthru
        _
    $region44: #{abstraction_embedding_forward.1} parent=5 // pred_fallthru
      _
    %p261 = scmp.le.s32.totalorder 1, %s14
    %p262 = scmp.lt.s32.totalorder %s14, 3
    %p263 = pnand %p261, %p262
    %p264 = pneg %p263
    // Predicated region
    $region49: #{abstraction_embedding_forward.1} parent=5 // pred_check
      _
    $region50: #{abstraction_embedding_forward.1} parent=5 // pred_check_branch
      %266 = sbr.rel (%p263) target = $region52
    $region51: #{abstraction_embedding_forward.1} parent=5 // pred_region
      %s267 = ssub.s32 %s14, 1
      %p268 = scmp.lt.s32.totalorder %s19, 1
      %s269 = scalar_select %p268, %s19, 1
      %s270 = smul.addr %s269, 6
      %s271 = smul.addr %s270, 8
      %s272 = scalar_lea.vmem %s0, %s271
      %p273 = pneg %p40
      %p274 = pneg %p37
      %p275 = pneg %p61
      %p276 = pneg %p58
      %p277 = pneg %p82
      %p278 = pneg %p79
      %p279 = pneg %p103
      %p280 = pneg %p100
      %p281 = pneg %p124
      %p282 = pneg %p121
      %p283 = pneg %p145
      %p284 = pneg %p142
      %p285 = pneg %p166
      %p286 = pneg %p163
      %p287 = pneg %p187
      %p288 = pneg %p184
      %p289 = pneg %p213
      %p290 = pneg %p210
      %p291 = scmp.lt.s32.totalorder %s19, 1
      %s292 = scalar_select %p291, %s19, 1
      %s293 = smul.addr %s292, 2
      %s294 = smul.addr %s293, 8
      %s295 = scalar_lea.vmem %s8, %s294
      %p296 = scmp.lt.s32.totalorder %s19, 1
      %s297 = scalar_select %p296, %s19, 1
      %s298 = smul.addr %s297, 6
      %s299 = smul.addr %s298, 8
      %s300 = scalar_lea.vmem %s0, %s299
      %p301 = scmp.lt.s32.totalorder %s19, 1
      %s302 = scalar_select %p301, %s19, 1
      %s303 = smul.addr %s302, 2
      %s304 = smul.addr %s303, 8
      %s305 = scalar_lea.vmem %s8, %s304
      %v306 = vld [vmem:[%s300] sm:$0xff]
      %v307 = vld [vmem:[%s300 + $0x8] sm:$0xff]
      %v308 = vld [vmem:[%s300 + $0x10] sm:$0xff]
      %v309 = vld [vmem:[%s300 + $0x18] sm:$0xff]
      %v310 = vld [vmem:[%s300 + $0x20] sm:$0xff]
      %v311 = vld [vmem:[%s300 + $0x28] sm:$0xff]
      %v312 = vmax.f32 %v306, 0.0
      %v313 = vmax.f32 %v307, 0.0
      %v314 = vmax.f32 %v308, 0.0
      %v315 = vmax.f32 %v309, 0.0
      %v316 = vmax.f32 %v310, 0.0
      %v317 = vmax.f32 %v311, 0.0
      %v318 = vld [vmem:[%s2] sm:$0xff]
      %v319 = vld [vmem:[%s2 + $0x8] sm:$0xff]
      %v320 = vld [vmem:[%s2 + $0x10] sm:$0xff]
      %v321 = vld [vmem:[%s2 + $0x18] sm:$0xff]
      %v322 = vld [vmem:[%s2 + $0x20] sm:$0xff]
      %v323 = vld [vmem:[%s2 + $0x28] sm:$0xff]
      %v324 = vld [vmem:[%s2 + $0x30] sm:$0xff]
      %v325 = vld [vmem:[%s2 + $0x38] sm:$0xff]
      %v326 = vld [vmem:[%s2 + $0x40] sm:$0xff]
      %v327 = vld [vmem:[%s2 + $0x48] sm:$0xff]
      %v328 = vld [vmem:[%s2 + $0x50] sm:$0xff]
      %v329 = vld [vmem:[%s2 + $0x58] sm:$0xff]
      %v330 = vld [vmem:[%s2 + $0x60] sm:$0xff]
      %v331 = vld [vmem:[%s2 + $0x68] sm:$0xff]
      %v332 = vld [vmem:[%s2 + $0x70] sm:$0xff]
      %v333 = vld [vmem:[%s2 + $0x78] sm:$0xff]
      %v334 = vld [vmem:[%s2 + $0x80] sm:$0xff]
      %v335 = vld [vmem:[%s2 + $0x88] sm:$0xff]
      %v336 = vld [vmem:[%s2 + $0x90] sm:$0xff]
      %v337 = vld [vmem:[%s2 + $0x98] sm:$0xff]
      %v338 = vld [vmem:[%s2 + $0xa0] sm:$0xff]
      %v339 = vld [vmem:[%s2 + $0xa8] sm:$0xff]
      %v340 = vld [vmem:[%s2 + $0xb0] sm:$0xff]
      %v341 = vld [vmem:[%s2 + $0xb8] sm:$0xff]
      %v342 = vld [vmem:[%s2 + $0xc0] sm:$0xff]
      %v343 = vld [vmem:[%s2 + $0xc8] sm:$0xff]
      %v344 = vld [vmem:[%s2 + $0xd0] sm:$0xff]
      %v345 = vld [vmem:[%s2 + $0xd8] sm:$0xff]
      %v346 = vld [vmem:[%s2 + $0xe0] sm:$0xff]
      %v347 = vld [vmem:[%s2 + $0xe8] sm:$0xff]
      %v348 = vld [vmem:[%s2 + $0xf0] sm:$0xff]
      %v349 = vld [vmem:[%s2 + $0xf8] sm:$0xff]
      %v350 = vld [vmem:[%s2 + $0x100] sm:$0xff]
      %v351 = vld [vmem:[%s2 + $0x108] sm:$0xff]
      %v352 = vld [vmem:[%s2 + $0x110] sm:$0xff]
      %v353 = vld [vmem:[%s2 + $0x118] sm:$0xff]
      %v354 = vld [vmem:[%s2 + $0x120] sm:$0xff]
      %v355 = vld [vmem:[%s2 + $0x128] sm:$0xff]
      %v356 = vld [vmem:[%s2 + $0x130] sm:$0xff]
      %v357 = vld [vmem:[%s2 + $0x138] sm:$0xff]
      %v358 = vld [vmem:[%s2 + $0x140] sm:$0xff]
      %v359 = vld [vmem:[%s2 + $0x148] sm:$0xff]
      %v360 = vld [vmem:[%s2 + $0x150] sm:$0xff]
      %v361 = vld [vmem:[%s2 + $0x158] sm:$0xff]
      %v362 = vld [vmem:[%s2 + $0x160] sm:$0xff]
      %v363 = vld [vmem:[%s2 + $0x168] sm:$0xff]
      %v364 = vld [vmem:[%s2 + $0x170] sm:$0xff]
      %v365 = vld [vmem:[%s2 + $0x178] sm:$0xff]
      %v366 = vld [vmem:[%s2 + $0x180] sm:$0xff]
      %v367 = vld [vmem:[%s2 + $0x188] sm:$0xff]
      %v368 = vld [vmem:[%s2 + $0x190] sm:$0xff]
      %v369 = vld [vmem:[%s2 + $0x198] sm:$0xff]
      %v370 = vld [vmem:[%s2 + $0x1a0] sm:$0xff]
      %v371 = vld [vmem:[%s2 + $0x1a8] sm:$0xff]
      %v372 = vld [vmem:[%s2 + $0x1b0] sm:$0xff]
      %v373 = vld [vmem:[%s2 + $0x1b8] sm:$0xff]
      %v374 = vld [vmem:[%s2 + $0x1c0] sm:$0xff]
      %v375 = vld [vmem:[%s2 + $0x1c8] sm:$0xff]
      %v376 = vld [vmem:[%s2 + $0x1d0] sm:$0xff]
      %v377 = vld [vmem:[%s2 + $0x1d8] sm:$0xff]
      %v378 = vld [vmem:[%s2 + $0x1e0] sm:$0xff]
      %v379 = vld [vmem:[%s2 + $0x1e8] sm:$0xff]
      %v380 = vld [vmem:[%s2 + $0x1f0] sm:$0xff]
      %v381 = vld [vmem:[%s2 + $0x1f8] sm:$0xff]
      %v382 = vld [vmem:[%s2 + $0x200] sm:$0xff]
      %v383 = vld [vmem:[%s2 + $0x208] sm:$0xff]
      %v384 = vld [vmem:[%s2 + $0x210] sm:$0xff]
      %v385 = vld [vmem:[%s2 + $0x218] sm:$0xff]
      %v386 = vld [vmem:[%s2 + $0x220] sm:$0xff]
      %v387 = vld [vmem:[%s2 + $0x228] sm:$0xff]
      %v388 = vld [vmem:[%s2 + $0x230] sm:$0xff]
      %v389 = vld [vmem:[%s2 + $0x238] sm:$0xff]
      %v390 = vld [vmem:[%s2 + $0x240] sm:$0xff]
      %v391 = vld [vmem:[%s2 + $0x248] sm:$0xff]
      %v392 = vld [vmem:[%s2 + $0x250] sm:$0xff]
      %v393 = vld [vmem:[%s2 + $0x258] sm:$0xff]
      %v394 = vld [vmem:[%s2 + $0x260] sm:$0xff]
      %v395 = vld [vmem:[%s2 + $0x268] sm:$0xff]
      %v396 = vld [vmem:[%s2 + $0x270] sm:$0xff]
      %v397 = vld [vmem:[%s2 + $0x278] sm:$0xff]
      %v398 = vld [vmem:[%s2 + $0x280] sm:$0xff]
      %v399 = vld [vmem:[%s2 + $0x288] sm:$0xff]
      %v400 = vld [vmem:[%s2 + $0x290] sm:$0xff]
      %v401 = vld [vmem:[%s2 + $0x298] sm:$0xff]
      %v402 = vld [vmem:[%s2 + $0x2a0] sm:$0xff]
      %v403 = vld [vmem:[%s2 + $0x2a8] sm:$0xff]
      %v404 = vld [vmem:[%s2 + $0x2b0] sm:$0xff]
      %v405 = vld [vmem:[%s2 + $0x2b8] sm:$0xff]
      %v406 = vld [vmem:[%s2 + $0x2c0] sm:$0xff]
      %v407 = vld [vmem:[%s2 + $0x2c8] sm:$0xff]
      %v408 = vld [vmem:[%s2 + $0x2d0] sm:$0xff]
      %v409 = vld [vmem:[%s2 + $0x2d8] sm:$0xff]
      %v410 = vld [vmem:[%s2 + $0x2e0] sm:$0xff]
      %v411 = vld [vmem:[%s2 + $0x2e8] sm:$0xff]
      %v412 = vld [vmem:[%s2 + $0x2f0] sm:$0xff]
      %v413 = vld [vmem:[%s2 + $0x2f8] sm:$0xff]
      %v414 = vld [vmem:[%s2 + $0x300] sm:$0xff]
      %v415 = vld [vmem:[%s2 + $0x308] sm:$0xff]
      %v416 = vld [vmem:[%s2 + $0x310] sm:$0xff]
      %v417 = vld [vmem:[%s2 + $0x318] sm:$0xff]
      %v418 = vld [vmem:[%s2 + $0x320] sm:$0xff]
      %v419 = vld [vmem:[%s2 + $0x328] sm:$0xff]
      %v420 = vld [vmem:[%s2 + $0x330] sm:$0xff]
      %v421 = vld [vmem:[%s2 + $0x338] sm:$0xff]
      %v422 = vld [vmem:[%s2 + $0x340] sm:$0xff]
      %v423 = vld [vmem:[%s2 + $0x348] sm:$0xff]
      %v424 = vld [vmem:[%s2 + $0x350] sm:$0xff]
      %v425 = vld [vmem:[%s2 + $0x358] sm:$0xff]
      %v426 = vld [vmem:[%s2 + $0x360] sm:$0xff]
      %v427 = vld [vmem:[%s2 + $0x368] sm:$0xff]
      %v428 = vld [vmem:[%s2 + $0x370] sm:$0xff]
      %v429 = vld [vmem:[%s2 + $0x378] sm:$0xff]
      %v430 = vld [vmem:[%s2 + $0x380] sm:$0xff]
      %v431 = vld [vmem:[%s2 + $0x388] sm:$0xff]
      %v432 = vld [vmem:[%s2 + $0x390] sm:$0xff]
      %v433 = vld [vmem:[%s2 + $0x398] sm:$0xff]
      %v434 = vld [vmem:[%s2 + $0x3a0] sm:$0xff]
      %v435 = vld [vmem:[%s2 + $0x3a8] sm:$0xff]
      %v436 = vld [vmem:[%s2 + $0x3b0] sm:$0xff]
      %v437 = vld [vmem:[%s2 + $0x3b8] sm:$0xff]
      %v438 = vld [vmem:[%s2 + $0x3c0] sm:$0xff]
      %v439 = vld [vmem:[%s2 + $0x3c8] sm:$0xff]
      %v440 = vld [vmem:[%s2 + $0x3d0] sm:$0xff]
      %v441 = vld [vmem:[%s2 + $0x3d8] sm:$0xff]
      %v442 = vld [vmem:[%s2 + $0x3e0] sm:$0xff]
      %v443 = vld [vmem:[%s2 + $0x3e8] sm:$0xff]
      %v444 = vld [vmem:[%s2 + $0x3f0] sm:$0xff]
      %v445 = vld [vmem:[%s2 + $0x3f8] sm:$0xff]
      %v446 = vld [vmem:[%s2 + $0x400] sm:$0xff]
      %v447 = vld [vmem:[%s2 + $0x408] sm:$0xff]
      %v448 = vld [vmem:[%s2 + $0x410] sm:$0xff]
      %v449 = vld [vmem:[%s2 + $0x418] sm:$0xff]
      %v450 = vld [vmem:[%s2 + $0x420] sm:$0xff]
      %v451 = vld [vmem:[%s2 + $0x428] sm:$0xff]
      %v452 = vld [vmem:[%s2 + $0x430] sm:$0xff]
      %v453 = vld [vmem:[%s2 + $0x438] sm:$0xff]
      %v454 = vld [vmem:[%s2 + $0x440] sm:$0xff]
      %v455 = vld [vmem:[%s2 + $0x448] sm:$0xff]
      %v456 = vld [vmem:[%s2 + $0x450] sm:$0xff]
      %v457 = vld [vmem:[%s2 + $0x458] sm:$0xff]
      %v458 = vld [vmem:[%s2 + $0x460] sm:$0xff]
      %v459 = vld [vmem:[%s2 + $0x468] sm:$0xff]
      %v460 = vld [vmem:[%s2 + $0x470] sm:$0xff]
      %v461 = vld [vmem:[%s2 + $0x478] sm:$0xff]
      %v462 = vld [vmem:[%s2 + $0x480] sm:$0xff]
      %v463 = vld [vmem:[%s2 + $0x488] sm:$0xff]
      %v464 = vld [vmem:[%s2 + $0x490] sm:$0xff]
      %v465 = vld [vmem:[%s2 + $0x498] sm:$0xff]
      %v466 = vld [vmem:[%s2 + $0x4a0] sm:$0xff]
      %v467 = vld [vmem:[%s2 + $0x4a8] sm:$0xff]
      %v468 = vld [vmem:[%s2 + $0x4b0] sm:$0xff]
      %v469 = vld [vmem:[%s2 + $0x4b8] sm:$0xff]
      %v470 = vld [vmem:[%s2 + $0x4c0] sm:$0xff]
      %v471 = vld [vmem:[%s2 + $0x4c8] sm:$0xff]
      %v472 = vld [vmem:[%s2 + $0x4d0] sm:$0xff]
      %v473 = vld [vmem:[%s2 + $0x4d8] sm:$0xff]
      %v474 = vld [vmem:[%s2 + $0x4e0] sm:$0xff]
      %v475 = vld [vmem:[%s2 + $0x4e8] sm:$0xff]
      %v476 = vld [vmem:[%s2 + $0x4f0] sm:$0xff]
      %v477 = vld [vmem:[%s2 + $0x4f8] sm:$0xff]
      %v478 = vld [vmem:[%s2 + $0x500] sm:$0xff]
      %v479 = vld [vmem:[%s2 + $0x508] sm:$0xff]
      %v480 = vld [vmem:[%s2 + $0x510] sm:$0xff]
      %v481 = vld [vmem:[%s2 + $0x518] sm:$0xff]
      %v482 = vld [vmem:[%s2 + $0x520] sm:$0xff]
      %v483 = vld [vmem:[%s2 + $0x528] sm:$0xff]
      %v484 = vld [vmem:[%s2 + $0x530] sm:$0xff]
      %v485 = vld [vmem:[%s2 + $0x538] sm:$0xff]
      %v486 = vld [vmem:[%s2 + $0x540] sm:$0xff]
      %v487 = vld [vmem:[%s2 + $0x548] sm:$0xff]
      %v488 = vld [vmem:[%s2 + $0x550] sm:$0xff]
      %v489 = vld [vmem:[%s2 + $0x558] sm:$0xff]
      %v490 = vld [vmem:[%s2 + $0x560] sm:$0xff]
      %v491 = vld [vmem:[%s2 + $0x568] sm:$0xff]
      %v492 = vld [vmem:[%s2 + $0x570] sm:$0xff]
      %v493 = vld [vmem:[%s2 + $0x578] sm:$0xff]
      %v494 = vld [vmem:[%s2 + $0x580] sm:$0xff]
      %v495 = vld [vmem:[%s2 + $0x588] sm:$0xff]
      %v496 = vld [vmem:[%s2 + $0x590] sm:$0xff]
      %v497 = vld [vmem:[%s2 + $0x598] sm:$0xff]
      %v498 = vld [vmem:[%s2 + $0x5a0] sm:$0xff]
      %v499 = vld [vmem:[%s2 + $0x5a8] sm:$0xff]
      %v500 = vld [vmem:[%s2 + $0x5b0] sm:$0xff]
      %v501 = vld [vmem:[%s2 + $0x5b8] sm:$0xff]
      %v502 = vld [vmem:[%s2 + $0x5c0] sm:$0xff]
      %v503 = vld [vmem:[%s2 + $0x5c8] sm:$0xff]
      %v504 = vld [vmem:[%s2 + $0x5d0] sm:$0xff]
      %v505 = vld [vmem:[%s2 + $0x5d8] sm:$0xff]
      %v506 = vld [vmem:[%s2 + $0x5e0] sm:$0xff]
      %v507 = vld [vmem:[%s2 + $0x5e8] sm:$0xff]
      %v508 = vld [vmem:[%s2 + $0x5f0] sm:$0xff]
      %v509 = vld [vmem:[%s2 + $0x5f8] sm:$0xff]
      %v510 = vld [vmem:[%s3] sm:$0xff]
      %v511 = vld [vmem:[%s3 + $0x8] sm:$0xff]
      %v512 = vld [vmem:[%s3 + $0x10] sm:$0xff]
      %v513 = vld [vmem:[%s3 + $0x18] sm:$0xff]
      %v514 = vld [vmem:[%s3 + $0x20] sm:$0xff]
      %v515 = vld [vmem:[%s3 + $0x28] sm:$0xff]
      %v516 = vld [vmem:[%s3 + $0x30] sm:$0xff]
      %v517 = vld [vmem:[%s3 + $0x38] sm:$0xff]
      %518 = vmatprep.subr.mxu0 %v319
      %519 = vmatpush1.msra.mxu0 %v318
      %520 = vmatprep.subr.mxu0 %v323
      %521 = vmatpush1.msra.mxu0 %v322
      %522 = vmatprep.subr.mxu0 %v327
      %523 = vmatpush1.msra.mxu0 %v326
      %524 = vmatprep.subr.mxu0 %v331
      %525 = vmatpush1.msra.mxu0 %v330
      %526 = vmatprep.subr.mxu0 %v335
      %527 = vmatpush1.msra.mxu0 %v334
      %528 = vmatprep.subr.mxu0 %v339
      %529 = vmatpush1.msra.mxu0 %v338
      %530 = vmatprep.subr.mxu0 %v343
      %531 = vmatpush1.msra.mxu0 %v342
      %532 = vmatprep.subr.mxu0 %v347
      %533 = vmatpush1.msra.mxu0 %v346
      %534 = vmatprep.subr.mxu0 %v351
      %535 = vmatpush1.msra.mxu0 %v350
      %536 = vmatprep.subr.mxu0 %v355
      %537 = vmatpush1.msra.mxu0 %v354
      %538 = vmatprep.subr.mxu0 %v359
      %539 = vmatpush1.msra.mxu0 %v358
      %540 = vmatprep.subr.mxu0 %v363
      %541 = vmatpush1.msra.mxu0 %v362
      %542 = vmatprep.subr.mxu0 %v367
      %543 = vmatpush1.msra.mxu0 %v366
      %544 = vmatprep.subr.mxu0 %v371
      %545 = vmatpush1.msra.mxu0 %v370
      %546 = vmatprep.subr.mxu0 %v375
      %547 = vmatpush1.msra.mxu0 %v374
      %548 = vmatprep.subr.mxu0 %v379
      %549 = vmatpush1.msra.mxu0 %v378
      %550 = vmatprep.subr.mxu0 %v383
      %551 = vmatpush1.msra.mxu0 %v382
      %552 = vmatprep.subr.mxu0 %v387
      %553 = vmatpush1.msra.mxu0 %v386
      %554 = vmatprep.subr.mxu0 %v391
      %555 = vmatpush1.msra.mxu0 %v390
      %556 = vmatprep.subr.mxu0 %v395
      %557 = vmatpush1.msra.mxu0 %v394
      %558 = vmatprep.subr.mxu0 %v399
      %559 = vmatpush1.msra.mxu0 %v398
      %560 = vmatprep.subr.mxu0 %v403
      %561 = vmatpush1.msra.mxu0 %v402
      %562 = vmatprep.subr.mxu0 %v407
      %563 = vmatpush1.msra.mxu0 %v406
      %564 = vmatprep.subr.mxu0 %v411
      %565 = vmatpush1.msra.mxu0 %v410
      %566 = vmatprep.subr.mxu0 %v415
      %567 = vmatpush1.msra.mxu0 %v414
      %568 = vmatprep.subr.mxu0 %v419
      %569 = vmatpush1.msra.mxu0 %v418
      %570 = vmatprep.subr.mxu0 %v423
      %571 = vmatpush1.msra.mxu0 %v422
      %572 = vmatprep.subr.mxu0 %v427
      %573 = vmatpush1.msra.mxu0 %v426
      %574 = vmatprep.subr.mxu0 %v431
      %575 = vmatpush1.msra.mxu0 %v430
      %576 = vmatprep.subr.mxu0 %v435
      %577 = vmatpush1.msra.mxu0 %v434
      %578 = vmatprep.subr.mxu0 %v439
      %579 = vmatpush1.msra.mxu0 %v438
      %580 = vmatprep.subr.mxu0 %v443
      %581 = vmatpush1.msra.mxu0 %v442
      %582 = vmatprep.mubr.f32.mxu0 %v313
      %583 = vmatmul.mubr.f32.gmra.mrb[0].mxu0 %v312
      %v584 = vpop.f32.mrb[0].mxu0
      %v585 = vadd.f32 %v510, %v584
      %v586 = vpop.f32.mrb[0].mxu0
      %v587 = vadd.f32 %v511, %v586
      %588 = vmatprep.mubr.f32.mxu0 %v316
      %589 = vmatmul.mubr.f32.gmra.mrb[0].mxu0 %v315
      %v590 = vpop.f32.mrb[0].mxu0
      %v591 = vadd.f32 %v514, %v590
      %v592 = vpop.f32.mrb[0].mxu0
      %v593 = vadd.f32 %v515, %v592
      %594 = vdwg.mxu0
      %595 = vmatprep.subr.mxu0 %v447
      %596 = vmatpush1.msra.mxu0 %v446
      %597 = vmatprep.subr.mxu0 %v451
      %598 = vmatpush1.msra.mxu0 %v450
      %599 = vmatprep.subr.mxu0 %v455
      %600 = vmatpush1.msra.mxu0 %v454
      %601 = vmatprep.subr.mxu0 %v459
      %602 = vmatpush1.msra.mxu0 %v458
      %603 = vmatprep.subr.mxu0 %v463
      %604 = vmatpush1.msra.mxu0 %v462
      %605 = vmatprep.subr.mxu0 %v467
      %606 = vmatpush1.msra.mxu0 %v466
      %607 = vmatprep.subr.mxu0 %v471
      %608 = vmatpush1.msra.mxu0 %v470
      %609 = vmatprep.subr.mxu0 %v475
      %610 = vmatpush1.msra.mxu0 %v474
      %611 = vmatprep.subr.mxu0 %v479
      %612 = vmatpush1.msra.mxu0 %v478
      %613 = vmatprep.subr.mxu0 %v483
      %614 = vmatpush1.msra.mxu0 %v482
      %615 = vmatprep.subr.mxu0 %v487
      %616 = vmatpush1.msra.mxu0 %v486
      %617 = vmatprep.subr.mxu0 %v491
      %618 = vmatpush1.msra.mxu0 %v490
      %619 = vmatprep.subr.mxu0 %v495
      %620 = vmatpush1.msra.mxu0 %v494
      %621 = vmatprep.subr.mxu0 %v499
      %622 = vmatpush1.msra.mxu0 %v498
      %623 = vmatprep.subr.mxu0 %v503
      %624 = vmatpush1.msra.mxu0 %v502
      %625 = vmatprep.subr.mxu0 %v507
      %626 = vmatpush1.msra.mxu0 %v506
      %627 = vmatprep.subr.mxu0 0.0
      %628 = vmatpush1.msra.mxu0 0.0
      %629 = vmatprep.subr.mxu0 0.0
      %630 = vmatpush1.msra.mxu0 0.0
      %631 = vmatprep.subr.mxu0 0.0
      %632 = vmatpush1.msra.mxu0 0.0
      %633 = vmatprep.subr.mxu0 0.0
      %634 = vmatpush1.msra.mxu0 0.0
      %635 = vmatprep.subr.mxu0 0.0
      %636 = vmatpush1.msra.mxu0 0.0
      %637 = vmatprep.subr.mxu0 0.0
      %638 = vmatpush1.msra.mxu0 0.0
      %639 = vmatprep.subr.mxu0 0.0
      %640 = vmatpush1.msra.mxu0 0.0
      %641 = vmatprep.subr.mxu0 0.0
      %642 = vmatpush1.msra.mxu0 0.0
      %643 = vmatprep.subr.mxu0 0.0
      %644 = vmatpush1.msra.mxu0 0.0
      %645 = vmatprep.subr.mxu0 0.0
      %646 = vmatpush1.msra.mxu0 0.0
      %647 = vmatprep.subr.mxu0 0.0
      %648 = vmatpush1.msra.mxu0 0.0
      %649 = vmatprep.subr.mxu0 0.0
      %650 = vmatpush1.msra.mxu0 0.0
      %651 = vmatprep.subr.mxu0 0.0
      %652 = vmatpush1.msra.mxu0 0.0
      %653 = vmatprep.subr.mxu0 0.0
      %654 = vmatpush1.msra.mxu0 0.0
      %655 = vmatprep.subr.mxu0 0.0
      %656 = vmatpush1.msra.mxu0 0.0
      %657 = vmatprep.subr.mxu0 0.0
      %658 = vmatpush1.msra.mxu0 0.0
      %659 = vmatprep.mubr.f32.mxu0 0.0
      %660 = vmatmul.mubr.f32.gmra.mrb[0].mxu0 %v314
      %v661 = vpop.f32.mrb[0].mxu0
      %v662 = vadd.f32 %v585, %v661
      %v663 = vpop.f32.mrb[0].mxu0
      %v664 = vadd.f32 %v587, %v663
      %665 = vmatprep.mubr.f32.mxu0 0.0
      %666 = vmatmul.mubr.f32.gmra.mrb[0].mxu0 %v317
      %v667 = vpop.f32.mrb[0].mxu0
      %v668 = vadd.f32 %v591, %v667
      %v669 = vpop.f32.mrb[0].mxu0
      %v670 = vadd.f32 %v593, %v669
      %671 = vdwg.mxu0
      %672 = vmatprep.subr.mxu0 %v321
      %673 = vmatpush1.msra.mxu0 %v320
      %674 = vmatprep.subr.mxu0 %v325
      %675 = vmatpush1.msra.mxu0 %v324
      %676 = vmatprep.subr.mxu0 %v329
      %677 = vmatpush1.msra.mxu0 %v328
      %678 = vmatprep.subr.mxu0 %v333
      %679 = vmatpush1.msra.mxu0 %v332
      %680 = vmatprep.subr.mxu0 %v337
      %681 = vmatpush1.msra.mxu0 %v336
      %682 = vmatprep.subr.mxu0 %v341
      %683 = vmatpush1.msra.mxu0 %v340
      %684 = vmatprep.subr.mxu0 %v345
      %685 = vmatpush1.msra.mxu0 %v344
      %686 = vmatprep.subr.mxu0 %v349
      %687 = vmatpush1.msra.mxu0 %v348
      %688 = vmatprep.subr.mxu0 %v353
      %689 = vmatpush1.msra.mxu0 %v352
      %690 = vmatprep.subr.mxu0 %v357
      %691 = vmatpush1.msra.mxu0 %v356
      %692 = vmatprep.subr.mxu0 %v361
      %693 = vmatpush1.msra.mxu0 %v360
      %694 = vmatprep.subr.mxu0 %v365
      %695 = vmatpush1.msra.mxu0 %v364
      %696 = vmatprep.subr.mxu0 %v369
      %697 = vmatpush1.msra.mxu0 %v368
      %698 = vmatprep.subr.mxu0 %v373
      %699 = vmatpush1.msra.mxu0 %v372
      %700 = vmatprep.subr.mxu0 %v377
      %701 = vmatpush1.msra.mxu0 %v376
      %702 = vmatprep.subr.mxu0 %v381
      %703 = vmatpush1.msra.mxu0 %v380
      %704 = vmatprep.subr.mxu0 %v385
      %705 = vmatpush1.msra.mxu0 %v384
      %706 = vmatprep.subr.mxu0 %v389
      %707 = vmatpush1.msra.mxu0 %v388
      %708 = vmatprep.subr.mxu0 %v393
      %709 = vmatpush1.msra.mxu0 %v392
      %710 = vmatprep.subr.mxu0 %v397
      %711 = vmatpush1.msra.mxu0 %v396
      %712 = vmatprep.subr.mxu0 %v401
      %713 = vmatpush1.msra.mxu0 %v400
      %714 = vmatprep.subr.mxu0 %v405
      %715 = vmatpush1.msra.mxu0 %v404
      %716 = vmatprep.subr.mxu0 %v409
      %717 = vmatpush1.msra.mxu0 %v408
      %718 = vmatprep.subr.mxu0 %v413
      %719 = vmatpush1.msra.mxu0 %v412
      %720 = vmatprep.subr.mxu0 %v417
      %721 = vmatpush1.msra.mxu0 %v416
      %722 = vmatprep.subr.mxu0 %v421
      %723 = vmatpush1.msra.mxu0 %v420
      %724 = vmatprep.subr.mxu0 %v425
      %725 = vmatpush1.msra.mxu0 %v424
      %726 = vmatprep.subr.mxu0 %v429
      %727 = vmatpush1.msra.mxu0 %v428
      %728 = vmatprep.subr.mxu0 %v433
      %729 = vmatpush1.msra.mxu0 %v432
      %730 = vmatprep.subr.mxu0 %v437
      %731 = vmatpush1.msra.mxu0 %v436
      %732 = vmatprep.subr.mxu0 %v441
      %733 = vmatpush1.msra.mxu0 %v440
      %734 = vmatprep.subr.mxu0 %v445
      %735 = vmatpush1.msra.mxu0 %v444
      %736 = vmatprep.mubr.f32.mxu0 %v313
      %737 = vmatmul.mubr.f32.gmra.mrb[0].mxu0 %v312
      %v738 = vpop.f32.mrb[0].mxu0
      %v739 = vadd.f32 %v512, %v738
      %v740 = vpop.f32.mrb[0].mxu0
      %v741 = vadd.f32 %v513, %v740
      %742 = vmatprep.mubr.f32.mxu0 %v316
      %743 = vmatmul.mubr.f32.gmra.mrb[0].mxu0 %v315
      %v744 = vpop.f32.mrb[0].mxu0
      %v745 = vadd.f32 %v516, %v744
      %v746 = vpop.f32.mrb[0].mxu0
      %v747 = vadd.f32 %v517, %v746
      %748 = vdwg.mxu0
      %749 = vmatprep.subr.mxu0 %v449
      %750 = vmatpush1.msra.mxu0 %v448
      %751 = vmatprep.subr.mxu0 %v453
      %752 = vmatpush1.msra.mxu0 %v452
      %753 = vmatprep.subr.mxu0 %v457
      %754 = vmatpush1.msra.mxu0 %v456
      %755 = vmatprep.subr.mxu0 %v461
      %756 = vmatpush1.msra.mxu0 %v460
      %757 = vmatprep.subr.mxu0 %v465
      %758 = vmatpush1.msra.mxu0 %v464
      %759 = vmatprep.subr.mxu0 %v469
      %760 = vmatpush1.msra.mxu0 %v468
      %761 = vmatprep.subr.mxu0 %v473
      %762 = vmatpush1.msra.mxu0 %v472
      %763 = vmatprep.subr.mxu0 %v477
      %764 = vmatpush1.msra.mxu0 %v476
      %765 = vmatprep.subr.mxu0 %v481
      %766 = vmatpush1.msra.mxu0 %v480
      %767 = vmatprep.subr.mxu0 %v485
      %768 = vmatpush1.msra.mxu0 %v484
      %769 = vmatprep.subr.mxu0 %v489
      %770 = vmatpush1.msra.mxu0 %v488
      %771 = vmatprep.subr.mxu0 %v493
      %772 = vmatpush1.msra.mxu0 %v492
      %773 = vmatprep.subr.mxu0 %v497
      %774 = vmatpush1.msra.mxu0 %v496
      %775 = vmatprep.subr.mxu0 %v501
      %776 = vmatpush1.msra.mxu0 %v500
      %777 = vmatprep.subr.mxu0 %v505
      %778 = vmatpush1.msra.mxu0 %v504
      %779 = vmatprep.subr.mxu0 %v509
      %780 = vmatpush1.msra.mxu0 %v508
      %781 = vmatprep.subr.mxu0 0.0
      %782 = vmatpush1.msra.mxu0 0.0
      %783 = vmatprep.subr.mxu0 0.0
      %784 = vmatpush1.msra.mxu0 0.0
      %785 = vmatprep.subr.mxu0 0.0
      %786 = vmatpush1.msra.mxu0 0.0
      %787 = vmatprep.subr.mxu0 0.0
      %788 = vmatpush1.msra.mxu0 0.0
      %789 = vmatprep.subr.mxu0 0.0
      %790 = vmatpush1.msra.mxu0 0.0
      %791 = vmatprep.subr.mxu0 0.0
      %792 = vmatpush1.msra.mxu0 0.0
      %793 = vmatprep.subr.mxu0 0.0
      %794 = vmatpush1.msra.mxu0 0.0
      %795 = vmatprep.subr.mxu0 0.0
      %796 = vmatpush1.msra.mxu0 0.0
      %797 = vmatprep.subr.mxu0 0.0
      %798 = vmatpush1.msra.mxu0 0.0
      %799 = vmatprep.subr.mxu0 0.0
      %800 = vmatpush1.msra.mxu0 0.0
      %801 = vmatprep.subr.mxu0 0.0
      %802 = vmatpush1.msra.mxu0 0.0
      %803 = vmatprep.subr.mxu0 0.0
      %804 = vmatpush1.msra.mxu0 0.0
      %805 = vmatprep.subr.mxu0 0.0
      %806 = vmatpush1.msra.mxu0 0.0
      %807 = vmatprep.subr.mxu0 0.0
      %808 = vmatpush1.msra.mxu0 0.0
      %809 = vmatprep.subr.mxu0 0.0
      %810 = vmatpush1.msra.mxu0 0.0
      %811 = vmatprep.subr.mxu0 0.0
      %812 = vmatpush1.msra.mxu0 0.0
      %813 = vmatprep.mubr.f32.mxu0 0.0
      %814 = vmatmul.mubr.f32.gmra.mrb[0].mxu0 %v314
      %v815 = vpop.f32.mrb[0].mxu0
      %v816 = vadd.f32 %v739, %v815
      %v817 = vpop.f32.mrb[0].mxu0
      %v818 = vadd.f32 %v741, %v817
      %819 = vmatprep.mubr.f32.mxu0 0.0
      %820 = vmatmul.mubr.f32.gmra.mrb[0].mxu0 %v317
      %v821 = vpop.f32.mrb[0].mxu0
      %v822 = vadd.f32 %v745, %v821
      %v823 = vpop.f32.mrb[0].mxu0
      %v824 = vadd.f32 %v747, %v823
      %825 = vdwg.mxu0
      %v826 = vmax.f32 %v662, 0.0
      %v827 = vmax.f32 %v664, 0.0
      %v828 = vmax.f32 %v816, 0.0
      %v829 = vmax.f32 %v818, 0.0
      %v830 = vmax.f32 %v668, 0.0
      %v831 = vmax.f32 %v670, 0.0
      %v832 = vmax.f32 %v822, 0.0
      %v833 = vmax.f32 %v824, 0.0
      %v834 = vld [vmem:[%s4] sm:$0xff]
      %v835 = vld [vmem:[%s4 + $0x8] sm:$0xff]
      %v836 = vld [vmem:[%s4 + $0x10] sm:$0xff]
      %v837 = vld [vmem:[%s4 + $0x18] sm:$0xff]
      %v838 = vld [vmem:[%s4 + $0x20] sm:$0xff]
      %v839 = vld [vmem:[%s4 + $0x28] sm:$0xff]
      %v840 = vld [vmem:[%s4 + $0x30] sm:$0xff]
      %v841 = vld [vmem:[%s4 + $0x38] sm:$0xff]
      %v842 = vld [vmem:[%s4 + $0x40] sm:$0xff]
      %v843 = vld [vmem:[%s4 + $0x48] sm:$0xff]
      %v844 = vld [vmem:[%s4 + $0x50] sm:$0xff]
      %v845 = vld [vmem:[%s4 + $0x58] sm:$0xff]
      %v846 = vld [vmem:[%s4 + $0x60] sm:$0xff]
      %v847 = vld [vmem:[%s4 + $0x68] sm:$0xff]
      %v848 = vld [vmem:[%s4 + $0x70] sm:$0xff]
      %v849 = vld [vmem:[%s4 + $0x78] sm:$0xff]
      %v850 = vld [vmem:[%s4 + $0x80] sm:$0xff]
      %v851 = vld [vmem:[%s4 + $0x88] sm:$0xff]
      %v852 = vld [vmem:[%s4 + $0x90] sm:$0xff]
      %v853 = vld [vmem:[%s4 + $0x98] sm:$0xff]
      %v854 = vld [vmem:[%s4 + $0xa0] sm:$0xff]
      %v855 = vld [vmem:[%s4 + $0xa8] sm:$0xff]
      %v856 = vld [vmem:[%s4 + $0xb0] sm:$0xff]
      %v857 = vld [vmem:[%s4 + $0xb8] sm:$0xff]
      %v858 = vld [vmem:[%s4 + $0xc0] sm:$0xff]
      %v859 = vld [vmem:[%s4 + $0xc8] sm:$0xff]
      %v860 = vld [vmem:[%s4 + $0xd0] sm:$0xff]
      %v861 = vld [vmem:[%s4 + $0xd8] sm:$0xff]
      %v862 = vld [vmem:[%s4 + $0xe0] sm:$0xff]
      %v863 = vld [vmem:[%s4 + $0xe8] sm:$0xff]
      %v864 = vld [vmem:[%s4 + $0xf0] sm:$0xff]
      %v865 = vld [vmem:[%s4 + $0xf8] sm:$0xff]
      %v866 = vld [vmem:[%s4 + $0x100] sm:$0xff]
      %v867 = vld [vmem:[%s4 + $0x108] sm:$0xff]
      %v868 = vld [vmem:[%s4 + $0x110] sm:$0xff]
      %v869 = vld [vmem:[%s4 + $0x118] sm:$0xff]
      %v870 = vld [vmem:[%s4 + $0x120] sm:$0xff]
      %v871 = vld [vmem:[%s4 + $0x128] sm:$0xff]
      %v872 = vld [vmem:[%s4 + $0x130] sm:$0xff]
      %v873 = vld [vmem:[%s4 + $0x138] sm:$0xff]
      %v874 = vld [vmem:[%s4 + $0x140] sm:$0xff]
      %v875 = vld [vmem:[%s4 + $0x148] sm:$0xff]
      %v876 = vld [vmem:[%s4 + $0x150] sm:$0xff]
      %v877 = vld [vmem:[%s4 + $0x158] sm:$0xff]
      %v878 = vld [vmem:[%s4 + $0x160] sm:$0xff]
      %v879 = vld [vmem:[%s4 + $0x168] sm:$0xff]
      %v880 = vld [vmem:[%s4 + $0x170] sm:$0xff]
      %v881 = vld [vmem:[%s4 + $0x178] sm:$0xff]
      %v882 = vld [vmem:[%s4 + $0x180] sm:$0xff]
      %v883 = vld [vmem:[%s4 + $0x188] sm:$0xff]
      %v884 = vld [vmem:[%s4 + $0x190] sm:$0xff]
      %v885 = vld [vmem:[%s4 + $0x198] sm:$0xff]
      %v886 = vld [vmem:[%s4 + $0x1a0] sm:$0xff]
      %v887 = vld [vmem:[%s4 + $0x1a8] sm:$0xff]
      %v888 = vld [vmem:[%s4 + $0x1b0] sm:$0xff]
      %v889 = vld [vmem:[%s4 + $0x1b8] sm:$0xff]
      %v890 = vld [vmem:[%s4 + $0x1c0] sm:$0xff]
      %v891 = vld [vmem:[%s4 + $0x1c8] sm:$0xff]
      %v892 = vld [vmem:[%s4 + $0x1d0] sm:$0xff]
      %v893 = vld [vmem:[%s4 + $0x1d8] sm:$0xff]
      %v894 = vld [vmem:[%s4 + $0x1e0] sm:$0xff]
      %v895 = vld [vmem:[%s4 + $0x1e8] sm:$0xff]
      %v896 = vld [vmem:[%s4 + $0x1f0] sm:$0xff]
      %v897 = vld [vmem:[%s4 + $0x1f8] sm:$0xff]
      %v898 = vld [vmem:[%s5] sm:$0xff]
      %v899 = vld [vmem:[%s5 + $0x8] sm:$0xff]
      %900 = vmatprep.subr.mxu0 0.0
      %901 = vmatpush1.msra.mxu0 %v834
      %902 = vmatprep.subr.mxu0 0.0
      %903 = vmatpush1.msra.mxu0 %v835
      %904 = vmatprep.subr.mxu0 0.0
      %905 = vmatpush1.msra.mxu0 %v836
      %906 = vmatprep.subr.mxu0 0.0
      %907 = vmatpush1.msra.mxu0 %v837
      %908 = vmatprep.subr.mxu0 0.0
      %909 = vmatpush1.msra.mxu0 %v838
      %910 = vmatprep.subr.mxu0 0.0
      %911 = vmatpush1.msra.mxu0 %v839
      %912 = vmatprep.subr.mxu0 0.0
      %913 = vmatpush1.msra.mxu0 %v840
      %914 = vmatprep.subr.mxu0 0.0
      %915 = vmatpush1.msra.mxu0 %v841
      %916 = vmatprep.subr.mxu0 0.0
      %917 = vmatpush1.msra.mxu0 %v842
      %918 = vmatprep.subr.mxu0 0.0
      %919 = vmatpush1.msra.mxu0 %v843
      %920 = vmatprep.subr.mxu0 0.0
      %921 = vmatpush1.msra.mxu0 %v844
      %922 = vmatprep.subr.mxu0 0.0
      %923 = vmatpush1.msra.mxu0 %v845
      %924 = vmatprep.subr.mxu0 0.0
      %925 = vmatpush1.msra.mxu0 %v846
      %926 = vmatprep.subr.mxu0 0.0
      %927 = vmatpush1.msra.mxu0 %v847
      %928 = vmatprep.subr.mxu0 0.0
      %929 = vmatpush1.msra.mxu0 %v848
      %930 = vmatprep.subr.mxu0 0.0
      %931 = vmatpush1.msra.mxu0 %v849
      %932 = vmatprep.subr.mxu0 0.0
      %933 = vmatpush1.msra.mxu0 %v850
      %934 = vmatprep.subr.mxu0 0.0
      %935 = vmatpush1.msra.mxu0 %v851
      %936 = vmatprep.subr.mxu0 0.0
      %937 = vmatpush1.msra.mxu0 %v852
      %938 = vmatprep.subr.mxu0 0.0
      %939 = vmatpush1.msra.mxu0 %v853
      %940 = vmatprep.subr.mxu0 0.0
      %941 = vmatpush1.msra.mxu0 %v854
      %942 = vmatprep.subr.mxu0 0.0
      %943 = vmatpush1.msra.mxu0 %v855
      %944 = vmatprep.subr.mxu0 0.0
      %945 = vmatpush1.msra.mxu0 %v856
      %946 = vmatprep.subr.mxu0 0.0
      %947 = vmatpush1.msra.mxu0 %v857
      %948 = vmatprep.subr.mxu0 0.0
      %949 = vmatpush1.msra.mxu0 %v858
      %950 = vmatprep.subr.mxu0 0.0
      %951 = vmatpush1.msra.mxu0 %v859
      %952 = vmatprep.subr.mxu0 0.0
      %953 = vmatpush1.msra.mxu0 %v860
      %954 = vmatprep.subr.mxu0 0.0
      %955 = vmatpush1.msra.mxu0 %v861
      %956 = vmatprep.subr.mxu0 0.0
      %957 = vmatpush1.msra.mxu0 %v862
      %958 = vmatprep.subr.mxu0 0.0
      %959 = vmatpush1.msra.mxu0 %v863
      %960 = vmatprep.subr.mxu0 0.0
      %961 = vmatpush1.msra.mxu0 %v864
      %962 = vmatprep.subr.mxu0 0.0
      %963 = vmatpush1.msra.mxu0 %v865
      %964 = vmatprep.mubr.f32.mxu0 %v827
      %965 = vmatmul.mubr.f32.gmra.mrb[0].mxu0 %v826
      %v966 = vpop.f32.mrb[0].mxu0
      %v967 = vadd.f32 %v898, %v966
      %v968 = vpop.f32.mrb[0].mxu0
      %969 = vmatprep.mubr.f32.mxu0 %v831
      %970 = vmatmul.mubr.f32.gmra.mrb[0].mxu0 %v830
      %v971 = vpop.f32.mrb[0].mxu0
      %v972 = vadd.f32 %v899, %v971
      %v973 = vpop.f32.mrb[0].mxu0
      %974 = vdwg.mxu0
      %975 = vmatprep.subr.mxu0 0.0
      %976 = vmatpush1.msra.mxu0 %v866
      %977 = vmatprep.subr.mxu0 0.0
      %978 = vmatpush1.msra.mxu0 %v867
      %979 = vmatprep.subr.mxu0 0.0
      %980 = vmatpush1.msra.mxu0 %v868
      %981 = vmatprep.subr.mxu0 0.0
      %982 = vmatpush1.msra.mxu0 %v869
      %983 = vmatprep.subr.mxu0 0.0
      %984 = vmatpush1.msra.mxu0 %v870
      %985 = vmatprep.subr.mxu0 0.0
      %986 = vmatpush1.msra.mxu0 %v871
      %987 = vmatprep.subr.mxu0 0.0
      %988 = vmatpush1.msra.mxu0 %v872
      %989 = vmatprep.subr.mxu0 0.0
      %990 = vmatpush1.msra.mxu0 %v873
      %991 = vmatprep.subr.mxu0 0.0
      %992 = vmatpush1.msra.mxu0 %v874
      %993 = vmatprep.subr.mxu0 0.0
      %994 = vmatpush1.msra.mxu0 %v875
      %995 = vmatprep.subr.mxu0 0.0
      %996 = vmatpush1.msra.mxu0 %v876
      %997 = vmatprep.subr.mxu0 0.0
      %998 = vmatpush1.msra.mxu0 %v877
      %999 = vmatprep.subr.mxu0 0.0
      %1000 = vmatpush1.msra.mxu0 %v878
      %1001 = vmatprep.subr.mxu0 0.0
      %1002 = vmatpush1.msra.mxu0 %v879
      %1003 = vmatprep.subr.mxu0 0.0
      %1004 = vmatpush1.msra.mxu0 %v880
      %1005 = vmatprep.subr.mxu0 0.0
      %1006 = vmatpush1.msra.mxu0 %v881
      %1007 = vmatprep.subr.mxu0 0.0
      %1008 = vmatpush1.msra.mxu0 %v882
      %1009 = vmatprep.subr.mxu0 0.0
      %1010 = vmatpush1.msra.mxu0 %v883
      %1011 = vmatprep.subr.mxu0 0.0
      %1012 = vmatpush1.msra.mxu0 %v884
      %1013 = vmatprep.subr.mxu0 0.0
      %1014 = vmatpush1.msra.mxu0 %v885
      %1015 = vmatprep.subr.mxu0 0.0
      %1016 = vmatpush1.msra.mxu0 %v886
      %1017 = vmatprep.subr.mxu0 0.0
      %1018 = vmatpush1.msra.mxu0 %v887
      %1019 = vmatprep.subr.mxu0 0.0
      %1020 = vmatpush1.msra.mxu0 %v888
      %1021 = vmatprep.subr.mxu0 0.0
      %1022 = vmatpush1.msra.mxu0 %v889
      %1023 = vmatprep.subr.mxu0 0.0
      %1024 = vmatpush1.msra.mxu0 %v890
      %1025 = vmatprep.subr.mxu0 0.0
      %1026 = vmatpush1.msra.mxu0 %v891
      %1027 = vmatprep.subr.mxu0 0.0
      %1028 = vmatpush1.msra.mxu0 %v892
      %1029 = vmatprep.subr.mxu0 0.0
      %1030 = vmatpush1.msra.mxu0 %v893
      %1031 = vmatprep.subr.mxu0 0.0
      %1032 = vmatpush1.msra.mxu0 %v894
      %1033 = vmatprep.subr.mxu0 0.0
      %1034 = vmatpush1.msra.mxu0 %v895
      %1035 = vmatprep.subr.mxu0 0.0
      %1036 = vmatpush1.msra.mxu0 %v896
      %1037 = vmatprep.subr.mxu0 0.0
      %1038 = vmatpush1.msra.mxu0 %v897
      %1039 = vmatprep.mubr.f32.mxu0 %v829
      %1040 = vmatmul.mubr.f32.gmra.mrb[0].mxu0 %v828
      %v1041 = vpop.f32.mrb[0].mxu0
      %v1042 = vadd.f32 %v967, %v1041
      %v1043 = vpop.f32.mrb[0].mxu0
      %1044 = vmatprep.mubr.f32.mxu0 %v833
      %1045 = vmatmul.mubr.f32.gmra.mrb[0].mxu0 %v832
      %v1046 = vpop.f32.mrb[0].mxu0
      %v1047 = vadd.f32 %v972, %v1046
      %v1048 = vpop.f32.mrb[0].mxu0
      %1049 = vdwg.mxu0
      %v1050 = vld [vmem:[%s1] sm:$0xff]
      %v1051 = vld [vmem:[%s1 + $0x8] sm:$0xff]
      %vm1052 = vcmask 130048
      %v1054 = vsel %vm1052, %v1050, 0
      %v1057 = vsel %vm1052, %v1051, 0
      %1059 = vmatprep.subr.mxu0 0.0
      %1060 = vmatpush1.msra.mxu0 %v1042
      %1061 = vmatprep.subr.mxu0 0.0
      %1062 = vmatpush1.msra.mxu0 %v1047
      %1063 = vmatprep.subr.mxu0 0.0
      %1064 = vmatpush1.msra.mxu0 0.0
      %1065 = vmatprep.subr.mxu0 0.0
      %1066 = vmatpush1.msra.mxu0 0.0
      %1067 = vmatprep.subr.mxu0 0.0
      %1068 = vmatpush1.msra.mxu0 0.0
      %1069 = vmatprep.subr.mxu0 0.0
      %1070 = vmatpush1.msra.mxu0 0.0
      %1071 = vmatprep.subr.mxu0 0.0
      %1072 = vmatpush1.msra.mxu0 0.0
      %1073 = vmatprep.subr.mxu0 0.0
      %1074 = vmatpush1.msra.mxu0 0.0
      %1075 = vmatprep.subr.mxu0 0.0
      %1076 = vmatpush1.msra.mxu0 0.0
      %1077 = vmatprep.subr.mxu0 0.0
      %1078 = vmatpush1.msra.mxu0 0.0
      %1079 = vmatprep.subr.mxu0 0.0
      %1080 = vmatpush1.msra.mxu0 0.0
      %1081 = vmatprep.subr.mxu0 0.0
      %1082 = vmatpush1.msra.mxu0 0.0
      %1083 = vmatprep.subr.mxu0 0.0
      %1084 = vmatpush1.msra.mxu0 0.0
      %1085 = vmatprep.subr.mxu0 0.0
      %1086 = vmatpush1.msra.mxu0 0.0
      %1087 = vmatprep.subr.mxu0 0.0
      %1088 = vmatpush1.msra.mxu0 0.0
      %1089 = vmatprep.subr.mxu0 0.0
      %1090 = vmatpush1.msra.mxu0 0.0
      %1091 = vmatprep.subr.mxu0 0.0
      %1092 = vmatpush1.msra.mxu0 0.0
      %1093 = vmatprep.subr.mxu0 0.0
      %1094 = vmatpush1.msra.mxu0 0.0
      %1095 = vmatprep.subr.mxu0 0.0
      %1096 = vmatpush1.msra.mxu0 0.0
      %1097 = vmatprep.subr.mxu0 0.0
      %1098 = vmatpush1.msra.mxu0 0.0
      %1099 = vmatprep.subr.mxu0 0.0
      %1100 = vmatpush1.msra.mxu0 0.0
      %1101 = vmatprep.subr.mxu0 0.0
      %1102 = vmatpush1.msra.mxu0 0.0
      %1103 = vmatprep.subr.mxu0 0.0
      %1104 = vmatpush1.msra.mxu0 0.0
      %1105 = vmatprep.subr.mxu0 0.0
      %1106 = vmatpush1.msra.mxu0 0.0
      %1107 = vmatprep.subr.mxu0 0.0
      %1108 = vmatpush1.msra.mxu0 0.0
      %1109 = vmatprep.subr.mxu0 0.0
      %1110 = vmatpush1.msra.mxu0 0.0
      %1111 = vmatprep.subr.mxu0 0.0
      %1112 = vmatpush1.msra.mxu0 0.0
      %1113 = vmatprep.subr.mxu0 0.0
      %1114 = vmatpush1.msra.mxu0 0.0
      %1115 = vmatprep.subr.mxu0 0.0
      %1116 = vmatpush1.msra.mxu0 0.0
      %1117 = vmatprep.subr.mxu0 0.0
      %1118 = vmatpush1.msra.mxu0 0.0
      %1119 = vmatprep.subr.mxu0 0.0
      %1120 = vmatpush1.msra.mxu0 0.0
      %1121 = vmatprep.subr.mxu0 0.0
      %1122 = vmatpush1.msra.mxu0 0.0
      %1123 = vmatprep.mubr.f32.mxu0 0.0
      %1124 = vmatmul.mubr.f32.gmra.mrb[0].mxu0 %v1054
      %v1125 = vpop.f32.mrb[0].mxu0
      %v1126 = vadd.f32 0.0, %v1125
      %v1127 = vpop.f32.mrb[0].mxu0
      %1128 = vmatprep.mubr.f32.mxu0 0.0
      %1129 = vmatmul.mubr.f32.gmra.mrb[0].mxu0 %v1057
      %v1130 = vpop.f32.mrb[0].mxu0
      %v1131 = vadd.f32 0.0, %v1130
      %v1132 = vpop.f32.mrb[0].mxu0
      %1133 = vdwg.mxu0
      %v1134 = vld [vmem:[%s6] sm:$0xff]
      %v1135 = vld [vmem:[%s6 + $0x8] sm:$0xff]
      %v1136 = vld [vmem:[%s6 + $0x10] sm:$0xff]
      %v1137 = vld [vmem:[%s6 + $0x18] sm:$0xff]
      %v1138 = vld [vmem:[%s6 + $0x20] sm:$0xff]
      %v1139 = vld [vmem:[%s6 + $0x28] sm:$0xff]
      %v1140 = vld [vmem:[%s6 + $0x30] sm:$0xff]
      %v1141 = vld [vmem:[%s6 + $0x38] sm:$0xff]
      %v1142 = vld [vmem:[%s6 + $0x40] sm:$0xff]
      %v1143 = vld [vmem:[%s6 + $0x48] sm:$0xff]
      %v1144 = vld [vmem:[%s6 + $0x50] sm:$0xff]
      %v1145 = vld [vmem:[%s6 + $0x58] sm:$0xff]
      %v1146 = vld [vmem:[%s6 + $0x60] sm:$0xff]
      %v1147 = vld [vmem:[%s6 + $0x68] sm:$0xff]
      %v1148 = vld [vmem:[%s6 + $0x70] sm:$0xff]
      %v1149 = vld [vmem:[%s6 + $0x78] sm:$0xff]
      %v1150 = vld [vmem:[%s7] sm:$0x1]
      %v1152 = vlaneseq
      %v1153 = vshrl.u32 %v1152, 7
      %v1154 = vsub.s32 0, %v1153
      %v1155 = vrot.slane %v1150, %v1154
      %1157 = vmatprep.subr.mxu0 0.0
      %1158 = vmatpush1.msra.mxu0 %v1134
      %1159 = vmatprep.subr.mxu0 0.0
      %1160 = vmatpush1.msra.mxu0 %v1135
      %1161 = vmatprep.subr.mxu0 0.0
      %1162 = vmatpush1.msra.mxu0 %v1136
      %1163 = vmatprep.subr.mxu0 0.0
      %1164 = vmatpush1.msra.mxu0 %v1137
      %1165 = vmatprep.subr.mxu0 0.0
      %1166 = vmatpush1.msra.mxu0 %v1138
      %1167 = vmatprep.subr.mxu0 0.0
      %1168 = vmatpush1.msra.mxu0 %v1139
      %1169 = vmatprep.subr.mxu0 0.0
      %1170 = vmatpush1.msra.mxu0 %v1140
      %1171 = vmatprep.subr.mxu0 0.0
      %1172 = vmatpush1.msra.mxu0 %v1141
      %1173 = vmatprep.subr.mxu0 0.0
      %1174 = vmatpush1.msra.mxu0 %v1142
      %1175 = vmatprep.subr.mxu0 0.0
      %1176 = vmatpush1.msra.mxu0 %v1143
      %1177 = vmatprep.subr.mxu0 0.0
      %1178 = vmatpush1.msra.mxu0 %v1144
      %1179 = vmatprep.subr.mxu0 0.0
      %1180 = vmatpush1.msra.mxu0 %v1145
      %1181 = vmatprep.subr.mxu0 0.0
      %1182 = vmatpush1.msra.mxu0 %v1146
      %1183 = vmatprep.subr.mxu0 0.0
      %1184 = vmatpush1.msra.mxu0 %v1147
      %1185 = vmatprep.subr.mxu0 0.0
      %1186 = vmatpush1.msra.mxu0 %v1148
      %1187 = vmatprep.subr.mxu0 0.0
      %1188 = vmatpush1.msra.mxu0 %v1149
      %1189 = vmatprep.subr.mxu0 0.0
      %1190 = vmatpush1.msra.mxu0 0.0
      %1191 = vmatprep.subr.mxu0 0.0
      %1192 = vmatpush1.msra.mxu0 0.0
      %1193 = vmatprep.subr.mxu0 0.0
      %1194 = vmatpush1.msra.mxu0 0.0
      %1195 = vmatprep.subr.mxu0 0.0
      %1196 = vmatpush1.msra.mxu0 0.0
      %1197 = vmatprep.subr.mxu0 0.0
      %1198 = vmatpush1.msra.mxu0 0.0
      %1199 = vmatprep.subr.mxu0 0.0
      %1200 = vmatpush1.msra.mxu0 0.0
      %1201 = vmatprep.subr.mxu0 0.0
      %1202 = vmatpush1.msra.mxu0 0.0
      %1203 = vmatprep.subr.mxu0 0.0
      %1204 = vmatpush1.msra.mxu0 0.0
      %1205 = vmatprep.subr.mxu0 0.0
      %1206 = vmatpush1.msra.mxu0 0.0
      %1207 = vmatprep.subr.mxu0 0.0
      %1208 = vmatpush1.msra.mxu0 0.0
      %1209 = vmatprep.subr.mxu0 0.0
      %1210 = vmatpush1.msra.mxu0 0.0
      %1211 = vmatprep.subr.mxu0 0.0
      %1212 = vmatpush1.msra.mxu0 0.0
      %1213 = vmatprep.subr.mxu0 0.0
      %1214 = vmatpush1.msra.mxu0 0.0
      %1215 = vmatprep.subr.mxu0 0.0
      %1216 = vmatpush1.msra.mxu0 0.0
      %1217 = vmatprep.subr.mxu0 0.0
      %1218 = vmatpush1.msra.mxu0 0.0
      %1219 = vmatprep.subr.mxu0 0.0
      %1220 = vmatpush1.msra.mxu0 0.0
      %1221 = vmatprep.mubr.f32.mxu0 0.0
      %1222 = vmatmul.mubr.f32.gmra.mrb[0].mxu0 %v1126
      %v1223 = vpop.f32.mrb[0].mxu0
      %v1224 = vadd.f32 %v1155, %v1223
      %v1225 = vpop.f32.mrb[0].mxu0
      %1226 = vmatprep.mubr.f32.mxu0 0.0
      %1227 = vmatmul.mubr.f32.gmra.mrb[0].mxu0 %v1131
      %v1228 = vpop.f32.mrb[0].mxu0
      %v1229 = vadd.f32 %v1155, %v1228
      %v1230 = vpop.f32.mrb[0].mxu0
      %1231 = vdwg.mxu0
      %1232 = vst [vmem:[%s305] sm:$0xff] %v1224
      %1233 = vst [vmem:[%s305 + $0x8] sm:$0xff] %v1229
      %p1234 = scmp.lt.s32.totalorder %s19, 1
      %s1235 = scalar_select %p1234, %s19, 1
      %s1236 = smul.addr %s1235, 2
      %s1237 = smul.addr %s1236, 8
      %s1238 = scalar_lea.vmem %s8, %s1237
      // Predicated region
      $region53: #{abstraction_embedding_forward.1} parent=51 // pred_check
        %p1239 = pneg %p210
      $region54: #{abstraction_embedding_forward.1} parent=51 // pred_check_branch
        %1241 = sbr.rel (%p1239) target = $region56
      $region55: #{abstraction_embedding_forward.1} parent=51 // pred_region
        _
      $region56: #{abstraction_embedding_forward.1} parent=51 // pred_fallthru
        _
    $region52: #{abstraction_embedding_forward.1} parent=5 // pred_fallthru
      _
    %p1242 = scmp.le.s32.totalorder 2, %s14
    // Predicated region
    $region57: #{abstraction_embedding_forward.1} parent=5 // pred_check
      %p1243 = pneg %p1242
    $region58: #{abstraction_embedding_forward.1} parent=5 // pred_check_branch
      %1245 = sbr.rel (%p1243) target = $region60
    $region59: #{abstraction_embedding_forward.1} parent=5 // pred_region
      %s1246 = ssub.s32 %s14, 2
      // Predicated region
      $region61: #{abstraction_embedding_forward.1} parent=59 // pred_check
        %p1247 = pneg %p216
      $region62: #{abstraction_embedding_forward.1} parent=59 // pred_check_branch
        %1249 = sbr.rel (%p1247) target = $region64
      $region63: #{abstraction_embedding_forward.1} parent=59 // pred_region
        %p1250 = scmp.lt.s32.totalorder %s20, 1
        %s1251 = scalar_select %p1250, %s20, 1
        %s1252 = smul.addr %s1251, 2
        %s1253 = smul.addr %s1252, 8
        %s1254 = scalar_lea.vmem %s8, %s1253
      $region64: #{abstraction_embedding_forward.1} parent=59 // pred_fallthru
        _
    $region60: #{abstraction_embedding_forward.1} parent=5 // pred_fallthru
      _
  $region6: #{abstraction_embedding_forward.1} parent=0 // loop_footer
    %s18 = sadd.s32 1, %s14
  $region7: #{abstraction_embedding_forward.1} parent=0 // loop_footer_branch
    %13 = sbr.rel target = $region3
  $region8: #{abstraction_embedding_forward.1} parent=0 // loop_exit
    _

</llo_original>
